<compile_context>
chip_gen: v7x
topology: tpu7x:2x2x1
jax: 0.10.0
libtpu: 0.0.40
codegen_flags: <defaults>
</compile_context>

<pallas_src>
import functools

import jax
import jax.numpy as jnp
from jax import lax
from jax.experimental import pallas as pl
from jax.experimental.pallas import tpu as pltpu


def _round_up(x, m):
    return (x + m - 1) // m * m


def _device_defaults():
    """Per-TPU-generation Cout-tile width and scoped-VMEM defaults."""
    kind = ""
    try:
        kind = jax.devices()[0].device_kind.lower()
    except Exception:
        pass
    is_v7 = "7" in kind                                   # e.g. "tpu7x"
    is_v6 = "v6" in kind                                   # e.g. "tpu v6 lite"
    is_v5e = ("v5 lite" in kind) or ("v5e" in kind) or ("v5litepod" in kind)
    mxu_width = 256 if (is_v6 or is_v7) else 128
    if is_v7:
        vmem_limit = 48 * 1024 * 1024      # v7x: 64 MiB physical VMEM per TC
    elif is_v6 or is_v5e:
        vmem_limit = 96 * 1024 * 1024      # v5e/v6e: 128 MiB physical VMEM
    else:
        vmem_limit = 64 * 1024 * 1024
    return mxu_width, vmem_limit


# ---------------------------------------------------------------------------
# Pallas kernel: fused im2col + matmul + bias + (optional) ReLU, NHWC layout
# ---------------------------------------------------------------------------
def _conv_kernel(x_ref, w_ref, b_ref, o_ref, acc_ref, *,
                 k, th, wo, cin, apply_relu, group_dx):
    """One (image n, Cout tile c, row tile t) grid step.

    x_ref:   (1, Hp, Wp, Cin)   whole padded image (resident across c, t)
    w_ref:   (k*k*Cin, tn)      flattened (dy, dx, ci)-ordered weights, 1 Cout tile
    b_ref:   (1, tn)            f32 bias tile
    o_ref:   (1, th*wo, tn)     lane-dense output row tile
    acc_ref: (th*wo, tn) f32    VMEM scratch accumulator
    """
    t = pl.program_id(2)
    row0 = t * th

    # Taps: (dy, first dx, number of dx slices fused into one deeper-K matmul).
    if group_dx:
        taps = [(dy, 0, k) for dy in range(k)]
    else:
        taps = [(dy, dx, 1) for dy in range(k) for dx in range(k)]

    for i, (dy, dx0, ndx) in enumerate(taps):
        slices = [x_ref[0, pl.ds(row0 + dy, th), pl.ds(dx0 + j, wo), :]
                  for j in range(ndx)]
        lhs = slices[0] if ndx == 1 else jnp.concatenate(slices, axis=-1)
        depth = ndx * cin
        # wo is a multiple of 8 -> merging (th, wo) is layout preserving.
        lhs = lhs.reshape(th * wo, depth)
        w_slc = w_ref[pl.ds((dy * k + dx0) * cin, depth), :]
        prod = jnp.dot(lhs, w_slc, preferred_element_type=jnp.float32)
        if i == 0:
            acc_ref[...] = prod + b_ref[...]   # bias folded into the first tap
        else:
            acc_ref[...] += prod

    res = acc_ref[...]
    if apply_relu:
        res = jnp.maximum(res, 0.0)
    o_ref[0, :, :] = res.astype(o_ref.dtype)


# ---------------------------------------------------------------------------
# Conv2d module equivalent (conv -> Identity BN -> ReLU)
# ---------------------------------------------------------------------------
def conv2d_forward(x, weight, bias, *, stride=1, same_padding=True, nl="relu",
                   bn=False, dilation=1, tn=None, row_tile_elems=None):
    """x: (N, Cin, H, W) NCHW; weight: (Cout, Cin, k, k); bias: (Cout,)."""
    if stride != 1 or dilation != 1:
        # TODO(synk): stride>1 / dilation>1 variants not implemented in the
        # fused kernel (module defaults are stride=1, dilation=1).
        raise NotImplementedError("only stride=1, dilation=1 implemented")
    if bn:
        # TODO(synk): bn=True (BatchNorm2d) not implemented; module default
        # bn=False -> Identity is what this kernel covers.
        raise NotImplementedError("bn=True not implemented")
    if nl not in ("relu", None):
        # TODO(synk): NL='prelu' (learnable slope) not implemented.
        raise NotImplementedError("only NL='relu' or NL=None implemented")

    N, Cin, H, W = x.shape
    Cout, _, k, _ = weight.shape
    pad = (k - 1) // 2 if same_padding else 0

    Ho = H + 2 * pad - k + 1
    Wo = W + 2 * pad - k + 1

    mxu_width, vmem_limit = _device_defaults()
    if tn is None:
        # 256-wide Cout tiles feed the full 256x256 MXU on v6e/v7x; keep 128
        # on v5e (4x 128x128 MXU) and for small Cout.
        tn = 256 if (mxu_width >= 256 and _round_up(Cout, 128) >= 256) else 128
    if row_tile_elems is None:
        row_tile_elems = 256 if tn == 256 else 512

    # Pad output width to a sublane multiple: the in-kernel row merge stays
    # layout-free and output stores are unmasked.
    Wo_pad = _round_up(Wo, 8)

    # Output-row tile: ~row_tile_elems rows of the (rows, Cout) matmul per
    # grid step; small (demo-sized) problems collapse to one step per image.
    th = max(1, min(Ho, row_tile_elems // max(Wo_pad, 1)))
    T = pl.cdiv(Ho, th)

    # NCHW -> NHWC once; pad spatially plus extra bottom rows / right columns
    # so every row tile reads a full (th + k - 1, Wo_pad + k - 1) window.
    # TODO(synk): keep NHWC end-to-end in the surrounding model to drop this
    # transpose/pad plumbing (it dominates at tiny sizes).
    x_nhwc = jnp.transpose(x, (0, 2, 3, 1))
    extra_h = T * th - Ho
    extra_w = Wo_pad - Wo
    xp = jnp.pad(x_nhwc, ((0, 0), (pad, pad + extra_h), (pad, pad + extra_w), (0, 0)))
    Hp = H + 2 * pad + extra_h      # = T*th + k - 1
    Wp = W + 2 * pad + extra_w      # = Wo_pad + k - 1

    # Weights -> (k*k*Cin, Cout) in (dy, dx, ci) row order; pad Cout to a
    # lane-dense multiple of tn.
    K = k * k * Cin
    Cout_pad = _round_up(Cout, tn)
    w_mat = jnp.transpose(weight, (2, 3, 1, 0)).reshape(K, Cout)
    w_mat = jnp.pad(w_mat, ((0, 0), (0, Cout_pad - Cout)))
    b_mat = jnp.pad(bias.astype(jnp.float32), (0, Cout_pad - Cout)).reshape(1, Cout_pad)
    Ct = Cout_pad // tn

    # Fuse the k dx taps of each dy into one deeper-K matmul when Cin is far
    # below the MXU contraction depth.
    group_dx = (Cin < 128) and (k > 1)

    kernel = functools.partial(_conv_kernel, k=k, th=th, wo=Wo_pad, cin=Cin,
                               apply_relu=(nl == "relu"), group_dx=group_dx)

    bytes_per = jnp.dtype(x.dtype).itemsize
    cost = pl.CostEstimate(
        flops=2 * N * T * th * Wo_pad * K * Cout_pad,
        transcendentals=0,
        bytes_accessed=(xp.size + N * (w_mat.size + b_mat.size)
                        + N * T * th * Wo_pad * Cout_pad) * bytes_per,
    )

    out = pl.pallas_call(
        kernel,
        out_shape=jax.ShapeDtypeStruct((N, T * th * Wo_pad, Cout_pad), x.dtype),
        grid_spec=pltpu.PrefetchScalarGridSpec(
            num_scalar_prefetch=0,
            # Row-tile axis innermost: weight/bias tiles stay VMEM-resident
            # across all row tiles; the padded image is only re-DMA'd when
            # the batch index changes.
            grid=(N, Ct, T),
            in_specs=[
                # TODO(synk): on v7x, for feature maps whose lane-padded image
                # exceeds ~16 MiB, switch this whole-image block to halo'd row
                # tiles (manual DMA) or single-buffer it (pl.Buffered(1)).
                pl.BlockSpec((1, Hp, Wp, Cin), lambda n, c, t: (n, 0, 0, 0)),
                pl.BlockSpec((K, tn), lambda n, c, t: (0, c)),
                pl.BlockSpec((1, tn), lambda n, c, t: (0, c)),
            ],
            out_specs=pl.BlockSpec((1, th * Wo_pad, tn), lambda n, c, t: (n, t, c)),
            scratch_shapes=[pltpu.VMEM((th * Wo_pad, tn), jnp.float32)],
        ),
        compiler_params=pltpu.CompilerParams(
            # Only the batch axis is megacore-parallel: on v7x each TC works
            # on disjoint images (no duplicated whole-image DMA); neutral on
            # single-TC v5e/v6e.
            dimension_semantics=("parallel", "arbitrary", "arbitrary"),
            vmem_limit_bytes=vmem_limit,
        ),
        cost_estimate=cost,
    )(xp, w_mat, b_mat)

    # (N, T*th*Wo_pad, Cout_pad) -> (N, Ho, Wo, Cout) -> NCHW.  The padded
    # rows/cols/lanes hold ReLU(bias) garbage and MUST be sliced off here.
    out = out.reshape(N, T * th, Wo_pad, Cout_pad)[:, :Ho, :Wo, :Cout]
    # TODO(synk): feed bf16 x/weights (keep the f32 accumulator) if the model
    # tolerates it -- halves HBM bytes and doubles MXU throughput.
    return jnp.transpose(out, (0, 3, 1, 2))


if __name__ == "__main__":
    key = jax.random.PRNGKey(0)
    k_x, k_w, k_b = jax.random.split(key, 3)

    # Module config: Conv2d(in=4, out=8, kernel_size=3, stride=1, NL='relu',
    #                       same_padding=True, bn=False, dilation=1)
    N, Cin, H, W = 2, 4, 16, 16
    Cout, ksz = 8, 3

    x = jax.random.normal(k_x, (N, Cin, H, W), dtype=jnp.float32)
    fan_in = Cin * ksz * ksz
    bound = 1.0 / (fan_in ** 0.5)
    weight = jax.random.uniform(k_w, (Cout, Cin, ksz, ksz),
                                minval=-bound, maxval=bound, dtype=jnp.float32)
    bias = jax.random.uniform(k_b, (Cout,), minval=-bound, maxval=bound,
                              dtype=jnp.float32)

    out = conv2d_forward(x, weight, bias, stride=1, same_padding=True, nl="relu")
    out = jax.block_until_ready(out)

    # Reference check against XLA conv (same NCHW / OIHW convention as PyTorch).
    ref = lax.conv_general_dilated(
        x, weight, window_strides=(1, 1),
        padding=[(1, 1), (1, 1)],
        dimension_numbers=("NCHW", "OIHW", "NCHW"),
    ) + bias.reshape(1, Cout, 1, 1)
    ref = jnp.maximum(ref, 0.0)

    assert out.shape == (N, Cout, H, W)
    assert jnp.allclose(out, ref, atol=1e-4, rtol=1e-4)

    print("KERNEL_OK")
</pallas_src>

<mosaic_0001>
module attributes {stable_mosaic.version = 11 : i64} {
  func.func @_conv_kernel(%arg0: i32, %arg1: i32, %arg2: i32, %arg3: memref<1x18x18x4xf32, #tpu.memory_space<vmem>>, %arg4: memref<36x128xf32, #tpu.memory_space<vmem>>, %arg5: memref<1x128xf32, #tpu.memory_space<vmem>>, %arg6: memref<1x256x128xf32, #tpu.memory_space<vmem>>, %arg7: memref<256x128xf32, #tpu.memory_space<vmem>>) attributes {dimension_semantics = [#tpu.dimension_semantics<parallel>, #tpu.dimension_semantics<arbitrary>, #tpu.dimension_semantics<arbitrary>], iteration_bounds = array<i64: 2, 1, 1>, scalar_prefetch = 0 : i64, scratch_operands = 1 : i64, tpu.core_type = #tpu.core_type<tc>, window_params = [{transform_indices = @transform_0, window_bounds = array<i64: 1, 18, 18, 4>}, {transform_indices = @transform_1, window_bounds = array<i64: 36, 128>}, {transform_indices = @transform_2, window_bounds = array<i64: 1, 128>}, {transform_indices = @transform_3, window_bounds = array<i64: 1, 256, 128>}]} {
    %c16_i32 = arith.constant 16 : i32
    %0 = arith.muli %arg2, %c16_i32 : i32
    %c0_i32 = arith.constant 0 : i32
    %1 = arith.addi %0, %c0_i32 : i32
    %c0 = arith.constant 0 : index
    %2 = arith.index_cast %1 : i32 to index
    %c0_0 = arith.constant 0 : index
    %c0_1 = arith.constant 0 : index
    %3 = vector.load %arg3[%c0, %2, %c0_0, %c0_1] : memref<1x18x18x4xf32, #tpu.memory_space<vmem>>, vector<1x16x16x4xf32>
    %4 = vector.shape_cast %3 : vector<1x16x16x4xf32> to vector<16x16x4xf32>
    %c0_i32_2 = arith.constant 0 : i32
    %5 = arith.addi %0, %c0_i32_2 : i32
    %c0_3 = arith.constant 0 : index
    %6 = arith.index_cast %5 : i32 to index
    %c1 = arith.constant 1 : index
    %c0_4 = arith.constant 0 : index
    %7 = vector.load %arg3[%c0_3, %6, %c1, %c0_4] : memref<1x18x18x4xf32, #tpu.memory_space<vmem>>, vector<1x16x16x4xf32>
    %8 = vector.shape_cast %7 : vector<1x16x16x4xf32> to vector<16x16x4xf32>
    %c0_i32_5 = arith.constant 0 : i32
    %9 = arith.addi %0, %c0_i32_5 : i32
    %c0_6 = arith.constant 0 : index
    %10 = arith.index_cast %9 : i32 to index
    %c2 = arith.constant 2 : index
    %c0_7 = arith.constant 0 : index
    %11 = vector.load %arg3[%c0_6, %10, %c2, %c0_7] : memref<1x18x18x4xf32, #tpu.memory_space<vmem>>, vector<1x16x16x4xf32>
    %12 = vector.shape_cast %11 : vector<1x16x16x4xf32> to vector<16x16x4xf32>
    %13 = tpu.concatenate %4, %8, %12 in 2 : vector<16x16x4xf32>, vector<16x16x4xf32>, vector<16x16x4xf32> -> vector<16x16x12xf32>
    %14 = vector.shape_cast %13 : vector<16x16x12xf32> to vector<256x12xf32>
    %c0_8 = arith.constant 0 : index
    %c0_9 = arith.constant 0 : index
    %15 = vector.load %arg4[%c0_8, %c0_9] : memref<36x128xf32, #tpu.memory_space<vmem>>, vector<12x128xf32>
    %cst = arith.constant dense<0.000000e+00> : vector<256x128xf32>
    %16 = tpu.matmul %14, %15, %cst {dimension_numbers = #tpu.dot_dimension_numbers<[1], [0], [0], [1], [0, 0, 1, 1], [], []>} : vector<256x12xf32>, vector<12x128xf32>, vector<256x128xf32> -> vector<256x128xf32>
    %c0_10 = arith.constant 0 : index
    %c0_11 = arith.constant 0 : index
    %17 = vector.load %arg5[%c0_10, %c0_11] : memref<1x128xf32, #tpu.memory_space<vmem>>, vector<1x128xf32>
    %18 = vector.broadcast %17 : vector<1x128xf32> to vector<256x128xf32>
    %19 = arith.addf %16, %18 : vector<256x128xf32>
    %c0_12 = arith.constant 0 : index
    %c0_13 = arith.constant 0 : index
    %20 = vector.load %arg7[%c0_12, %c0_13] : memref<256x128xf32, #tpu.memory_space<vmem>>, vector<256x128xf32>
    tpu.vector_store %arg7[%c0_12, %c0_13], %19 {strides = array<i32>} : memref<256x128xf32, #tpu.memory_space<vmem>>, vector<256x128xf32>,
    %c1_i32 = arith.constant 1 : i32
    %21 = arith.addi %0, %c1_i32 : i32
    %c0_14 = arith.constant 0 : index
    %22 = arith.index_cast %21 : i32 to index
    %c0_15 = arith.constant 0 : index
    %c0_16 = arith.constant 0 : index
    %23 = vector.load %arg3[%c0_14, %22, %c0_15, %c0_16] : memref<1x18x18x4xf32, #tpu.memory_space<vmem>>, vector<1x16x16x4xf32>
    %24 = vector.shape_cast %23 : vector<1x16x16x4xf32> to vector<16x16x4xf32>
    %c1_i32_17 = arith.constant 1 : i32
    %25 = arith.addi %0, %c1_i32_17 : i32
    %c0_18 = arith.constant 0 : index
    %26 = arith.index_cast %25 : i32 to index
    %c1_19 = arith.constant 1 : index
    %c0_20 = arith.constant 0 : index
    %27 = vector.load %arg3[%c0_18, %26, %c1_19, %c0_20] : memref<1x18x18x4xf32, #tpu.memory_space<vmem>>, vector<1x16x16x4xf32>
    %28 = vector.shape_cast %27 : vector<1x16x16x4xf32> to vector<16x16x4xf32>
    %c1_i32_21 = arith.constant 1 : i32
    %29 = arith.addi %0, %c1_i32_21 : i32
    %c0_22 = arith.constant 0 : index
    %30 = arith.index_cast %29 : i32 to index
    %c2_23 = arith.constant 2 : index
    %c0_24 = arith.constant 0 : index
    %31 = vector.load %arg3[%c0_22, %30, %c2_23, %c0_24] : memref<1x18x18x4xf32, #tpu.memory_space<vmem>>, vector<1x16x16x4xf32>
    %32 = vector.shape_cast %31 : vector<1x16x16x4xf32> to vector<16x16x4xf32>
    %33 = tpu.concatenate %24, %28, %32 in 2 : vector<16x16x4xf32>, vector<16x16x4xf32>, vector<16x16x4xf32> -> vector<16x16x12xf32>
    %34 = vector.shape_cast %33 : vector<16x16x12xf32> to vector<256x12xf32>
    %c12 = arith.constant 12 : index
    %c0_25 = arith.constant 0 : index
    %35 = vector.load %arg4[%c12, %c0_25] : memref<36x128xf32, #tpu.memory_space<vmem>>, vector<12x128xf32>
    %cst_26 = arith.constant dense<0.000000e+00> : vector<256x128xf32>
    %36 = tpu.matmul %34, %35, %cst_26 {dimension_numbers = #tpu.dot_dimension_numbers<[1], [0], [0], [1], [0, 0, 1, 1], [], []>} : vector<256x12xf32>, vector<12x128xf32>, vector<256x128xf32> -> vector<256x128xf32>
    %c0_27 = arith.constant 0 : index
    %c0_28 = arith.constant 0 : index
    %37 = vector.load %arg7[%c0_27, %c0_28] : memref<256x128xf32, #tpu.memory_space<vmem>>, vector<256x128xf32>
    %38 = arith.addf %37, %36 : vector<256x128xf32>
    %c0_29 = arith.constant 0 : index
    %c0_30 = arith.constant 0 : index
    %39 = vector.load %arg7[%c0_29, %c0_30] : memref<256x128xf32, #tpu.memory_space<vmem>>, vector<256x128xf32>
    tpu.vector_store %arg7[%c0_29, %c0_30], %38 {strides = array<i32>} : memref<256x128xf32, #tpu.memory_space<vmem>>, vector<256x128xf32>,
    %c2_i32 = arith.constant 2 : i32
    %40 = arith.addi %0, %c2_i32 : i32
    %c0_31 = arith.constant 0 : index
    %41 = arith.index_cast %40 : i32 to index
    %c0_32 = arith.constant 0 : index
    %c0_33 = arith.constant 0 : index
    %42 = vector.load %arg3[%c0_31, %41, %c0_32, %c0_33] : memref<1x18x18x4xf32, #tpu.memory_space<vmem>>, vector<1x16x16x4xf32>
    %43 = vector.shape_cast %42 : vector<1x16x16x4xf32> to vector<16x16x4xf32>
    %c2_i32_34 = arith.constant 2 : i32
    %44 = arith.addi %0, %c2_i32_34 : i32
    %c0_35 = arith.constant 0 : index
    %45 = arith.index_cast %44 : i32 to index
    %c1_36 = arith.constant 1 : index
    %c0_37 = arith.constant 0 : index
    %46 = vector.load %arg3[%c0_35, %45, %c1_36, %c0_37] : memref<1x18x18x4xf32, #tpu.memory_space<vmem>>, vector<1x16x16x4xf32>
    %47 = vector.shape_cast %46 : vector<1x16x16x4xf32> to vector<16x16x4xf32>
    %c2_i32_38 = arith.constant 2 : i32
    %48 = arith.addi %0, %c2_i32_38 : i32
    %c0_39 = arith.constant 0 : index
    %49 = arith.index_cast %48 : i32 to index
    %c2_40 = arith.constant 2 : index
    %c0_41 = arith.constant 0 : index
    %50 = vector.load %arg3[%c0_39, %49, %c2_40, %c0_41] : memref<1x18x18x4xf32, #tpu.memory_space<vmem>>, vector<1x16x16x4xf32>
    %51 = vector.shape_cast %50 : vector<1x16x16x4xf32> to vector<16x16x4xf32>
    %52 = tpu.concatenate %43, %47, %51 in 2 : vector<16x16x4xf32>, vector<16x16x4xf32>, vector<16x16x4xf32> -> vector<16x16x12xf32>
    %53 = vector.shape_cast %52 : vector<16x16x12xf32> to vector<256x12xf32>
    %c24 = arith.constant 24 : index
    %c0_42 = arith.constant 0 : index
    %54 = vector.load %arg4[%c24, %c0_42] : memref<36x128xf32, #tpu.memory_space<vmem>>, vector<12x128xf32>
    %cst_43 = arith.constant dense<0.000000e+00> : vector<256x128xf32>
    %55 = tpu.matmul %53, %54, %cst_43 {dimension_numbers = #tpu.dot_dimension_numbers<[1], [0], [0], [1], [0, 0, 1, 1], [], []>} : vector<256x12xf32>, vector<12x128xf32>, vector<256x128xf32> -> vector<256x128xf32>
    %c0_44 = arith.constant 0 : index
    %c0_45 = arith.constant 0 : index
    %56 = vector.load %arg7[%c0_44, %c0_45] : memref<256x128xf32, #tpu.memory_space<vmem>>, vector<256x128xf32>
    %57 = arith.addf %56, %55 : vector<256x128xf32>
    %c0_46 = arith.constant 0 : index
    %c0_47 = arith.constant 0 : index
    %58 = vector.load %arg7[%c0_46, %c0_47] : memref<256x128xf32, #tpu.memory_space<vmem>>, vector<256x128xf32>
    tpu.vector_store %arg7[%c0_46, %c0_47], %57 {strides = array<i32>} : memref<256x128xf32, #tpu.memory_space<vmem>>, vector<256x128xf32>,
    %c0_48 = arith.constant 0 : index
    %c0_49 = arith.constant 0 : index
    %59 = vector.load %arg7[%c0_48, %c0_49] : memref<256x128xf32, #tpu.memory_space<vmem>>, vector<256x128xf32>
    %cst_50 = arith.constant 0.000000e+00 : f32
    %60 = vector.broadcast %cst_50 : f32 to vector<256x128xf32>
    %61 = arith.maximumf %59, %60 : vector<256x128xf32>
    %c0_51 = arith.constant 0 : index
    %c0_52 = arith.constant 0 : index
    %c0_53 = arith.constant 0 : index
    %62 = vector.load %arg6[%c0_51, %c0_52, %c0_53] : memref<1x256x128xf32, #tpu.memory_space<vmem>>, vector<1x256x128xf32>
    %63 = vector.shape_cast %62 : vector<1x256x128xf32> to vector<256x128xf32>
    %64 = vector.shape_cast %61 : vector<256x128xf32> to vector<1x256x128xf32>
    tpu.vector_store %arg6[%c0_51, %c0_52, %c0_53], %64 {strides = array<i32>} : memref<1x256x128xf32, #tpu.memory_space<vmem>>, vector<1x256x128xf32>,
    return
  }
  func.func @transform_0(%arg0: i32, %arg1: i32, %arg2: i32) -> (i32, i32, i32, i32) {
    %c0_i32 = arith.constant 0 : i32
    %c0_i32_0 = arith.constant 0 : i32
    %c0_i32_1 = arith.constant 0 : i32
    %c0_i32_2 = arith.constant 0 : i32
    return %arg0, %c0_i32, %c0_i32_0, %c0_i32_1 : i32, i32, i32, i32
  }
  func.func @transform_1(%arg0: i32, %arg1: i32, %arg2: i32) -> (i32, i32) {
    %c0_i32 = arith.constant 0 : i32
    %c0_i32_0 = arith.constant 0 : i32
    return %c0_i32, %arg1 : i32, i32
  }
  func.func @transform_2(%arg0: i32, %arg1: i32, %arg2: i32) -> (i32, i32) {
    %c0_i32 = arith.constant 0 : i32
    %c0_i32_0 = arith.constant 0 : i32
    return %c0_i32, %arg1 : i32, i32
  }
  func.func @transform_3(%arg0: i32, %arg1: i32, %arg2: i32) -> (i32, i32, i32) {
    %c0_i32 = arith.constant 0 : i32
    return %arg0, %arg2, %arg1 : i32, i32, i32
  }
}

</mosaic_0001>

<llo_original>
// kernel: tpu_custom_call.1
$region0: #{tpu_custom_call.1}
  #allocation0 [shape = 'u32[]', space=smem, size = 0x4, offset = 0x4, fixed_abs, tag = 'smem constant byte address 0x4 - core index']
  #allocation1 [shape = 'u32[144,128]{1,0:T(1,128)}', space=vmem, size = 0x12000, scoped, tag = 'internal scratch']
  #allocation2 [shape = 'f32[256,128]{1,0:T(8,128)}', space=vmem, size = 0x20000, scoped, tag = 'scratch operand']
  %s0 = inlined_call_operand.hbm [shape: f32[2,18,18,4], index: 0, kind: input, shape index: {}]
  %s1 = inlined_call_operand.hbm [shape: f32[36,128], index: 1, kind: input, shape index: {}]
  %s2 = inlined_call_operand.hbm [shape: f32[1,128], index: 2, kind: input, shape index: {}]
  %s3 = inlined_call_operand.hbm [shape: f32[2,256,128], index: 3, kind: output, shape index: {}]
  %s4 = sld [smem:[#allocation0]]
  $region57: #{tpu_custom_call.1} parent=0
    _
  %s6 = ssub.s32 1, %s4
  %s7 = scalar_select 0, %s6, %s4
  $region1: #{tpu_custom_call.1} parent=0
    #allocation3 [shape = 'u8[442368]{0}', space=vmem, size = 0x6c000, scoped, tag = 'input window, operand 0']
    #allocation4 [shape = 's32[2]{0}', space=sflag, size = 0x8, scoped, tag = 'scoped memory for tpu_custom_call.1']
    #allocation5 [shape = 's32[2]{0}', space=sflag, size = 0x8, scoped, tag = 'scoped memory for tpu_custom_call.1']
    #allocation6 [shape = 'u8[20480]{0}', space=vmem, size = 0x5000, scoped, tag = 'input window, operand 1, single buffered']
    #allocation7 [shape = 's32[1]{0}', space=sflag, size = 0x4, scoped, tag = 'scoped memory for tpu_custom_call.1']
    #allocation8 [shape = 'u8[512]{0}', space=vmem, size = 0x400, scoped, tag = 'input window, operand 2, single buffered']
    #allocation9 [shape = 'u8[262144]{0}', space=vmem, size = 0x40000, scoped, tag = 'output window, operand 0']
    %8 = vsyncpa [#allocation4], 0
    %s9 = scalar_lea.sflag [#allocation4], 1
    %10 = vsyncpa %s9, 0
    %11 = vsyncpa [#allocation7], 0
    %12 = vsyncpa [#allocation5], 0
    %s13 = scalar_lea.sflag [#allocation5], 1
    %14 = vsyncpa %s13, 0
    loop: start=0, step=1, limit=4
    $region2: #{tpu_custom_call.1} parent=1 // loop_pre_header
      _
    $region3: #{tpu_custom_call.1} parent=1 // loop_header
      %s16 = sphi 0, %s20
      %p17 = scmp.ge.s32.totalorder %s16, 4
      %s23 = sphi 0, %s42
      %s24 = sphi 0, %s38
      %s25 = sphi 0, %s34
      %s26 = sphi 0, %s23
      %s27 = sphi 0, %s24
      %s28 = sphi 0, %s25
      %s29 = sphi 0, %s26
      %s30 = sphi 0, %s27
      %s31 = sphi 0, %s28
      %s45 = sphi 0, %s47
      %s48 = sphi 0, %s45
      %s49 = sphi 0, %s48
      %s65 = sphi 0, %s49
      %s71 = sphi 0, %s73
      %s74 = sphi 0, %s71
      %s75 = sphi 0, %s74
      %s91 = sphi 0, %s75
      %s97 = sphi 0, %s99
      %s100 = sphi 0, %s97
      %s101 = sphi 0, %s100
      %s117 = sphi 0, %s101
      %s127 = sphi 0, %s129
      %s130 = sphi 0, %s127
      %s131 = sphi 0, %s130
      %s147 = sphi 0, %s131
    $region4: #{tpu_custom_call.1} parent=1 // loop_header_branch
      %19 = sbr.rel (%p17) target = $region8
    $region5: #{tpu_custom_call.1} parent=1 // loop_body
      %s21 = ssub.s32 %s16, 1
      %s22 = ssub.s32 %s16, 2
      %s32 = sadd.s32 1, %s25
      %p33 = scmp.ge.s32.totalorder %s32, 1
      %s34 = scalar_select %p33, 0, %s32
      %s35 = sadd.s32 1, %s24
      %s36 = scalar_select %p33, %s35, %s24
      %p37 = scmp.ge.s32.totalorder %s36, 1
      %s38 = scalar_select %p37, 0, %s36
      %s39 = sadd.s32 1, %s23
      %s40 = scalar_select %p37, %s39, %s23
      %p41 = scmp.ge.s32.totalorder %s40, 2
      %s42 = scalar_select %p41, 0, %s40
      %s43 = ssub.s32 %s23, %s42
      %p44 = scmp.eq.s32.totalorder %s43, 0
      %s46 = sadd.s32 %s45, 1
      %s47 = scalar_select %p44, %s45, %s46
      %p50 = pneg %p44
      %p51 = scmp.eq.s32.totalorder %s16, 1
      %p52 = por %p50, %p51
      %p53 = scmp.ne.s32.totalorder %s45, %s48
      %p54 = scmp.eq.s32.totalorder %s16, 0
      %p55 = por %p53, %p54
      %p56 = scmp.ne.s32.totalorder %s45, %s48
      %p57 = scmp.eq.s32.totalorder %s21, 1
      %p58 = por %p56, %p57
      %p59 = scmp.ne.s32.totalorder %s48, %s49
      %p60 = scmp.eq.s32.totalorder %s21, 0
      %p61 = por %p59, %p60
      %p62 = scmp.ne.s32.totalorder %s48, %s49
      %p63 = scmp.eq.s32.totalorder %s22, 1
      %p64 = por %p62, %p63
      %p66 = scmp.ne.s32.totalorder %s49, %s65
      %p67 = scmp.eq.s32.totalorder %s22, 0
      %p68 = por %p66, %p67
      %s69 = ssub.s32 %s24, %s38
      %p70 = scmp.eq.s32.totalorder %s69, 0
      %s72 = sadd.s32 %s71, 1
      %s73 = scalar_select %p70, %s71, %s72
      %p76 = pneg %p70
      %p77 = scmp.eq.s32.totalorder %s16, 1
      %p78 = por %p76, %p77
      %p79 = scmp.ne.s32.totalorder %s71, %s74
      %p80 = scmp.eq.s32.totalorder %s16, 0
      %p81 = por %p79, %p80
      %p82 = scmp.ne.s32.totalorder %s71, %s74
      %p83 = scmp.eq.s32.totalorder %s21, 1
      %p84 = por %p82, %p83
      %p85 = scmp.ne.s32.totalorder %s74, %s75
      %p86 = scmp.eq.s32.totalorder %s21, 0
      %p87 = por %p85, %p86
      %p88 = scmp.ne.s32.totalorder %s74, %s75
      %p89 = scmp.eq.s32.totalorder %s22, 1
      %p90 = por %p88, %p89
      %p92 = scmp.ne.s32.totalorder %s75, %s91
      %p93 = scmp.eq.s32.totalorder %s22, 0
      %p94 = por %p92, %p93
      %s95 = ssub.s32 %s24, %s38
      %p96 = scmp.eq.s32.totalorder %s95, 0
      %s98 = sadd.s32 %s97, 1
      %s99 = scalar_select %p96, %s97, %s98
      %p102 = pneg %p96
      %p103 = scmp.eq.s32.totalorder %s16, 1
      %p104 = por %p102, %p103
      %p105 = scmp.ne.s32.totalorder %s97, %s100
      %p106 = scmp.eq.s32.totalorder %s16, 0
      %p107 = por %p105, %p106
      %p108 = scmp.ne.s32.totalorder %s97, %s100
      %p109 = scmp.eq.s32.totalorder %s21, 1
      %p110 = por %p108, %p109
      %p111 = scmp.ne.s32.totalorder %s100, %s101
      %p112 = scmp.eq.s32.totalorder %s21, 0
      %p113 = por %p111, %p112
      %p114 = scmp.ne.s32.totalorder %s100, %s101
      %p115 = scmp.eq.s32.totalorder %s22, 1
      %p116 = por %p114, %p115
      %p118 = scmp.ne.s32.totalorder %s101, %s117
      %p119 = scmp.eq.s32.totalorder %s22, 0
      %p120 = por %p118, %p119
      %s121 = ssub.s32 %s23, %s42
      %s122 = ssub.s32 %s25, %s34
      %s123 = sor.u32 %s121, %s122
      %s124 = ssub.s32 %s24, %s38
      %s125 = sor.u32 %s123, %s124
      %p126 = scmp.eq.s32.totalorder %s125, 0
      %s128 = sadd.s32 %s127, 1
      %s129 = scalar_select %p126, %s127, %s128
      %p132 = pneg %p126
      %p133 = scmp.eq.s32.totalorder %s16, 1
      %p134 = por %p132, %p133
      %p135 = scmp.ne.s32.totalorder %s127, %s130
      %p136 = scmp.eq.s32.totalorder %s16, 0
      %p137 = por %p135, %p136
      %p138 = scmp.ne.s32.totalorder %s127, %s130
      %p139 = scmp.eq.s32.totalorder %s21, 1
      %p140 = por %p138, %p139
      %p141 = scmp.ne.s32.totalorder %s130, %s131
      %p142 = scmp.eq.s32.totalorder %s21, 0
      %p143 = por %p141, %p142
      %p144 = scmp.ne.s32.totalorder %s130, %s131
      %p145 = scmp.eq.s32.totalorder %s22, 1
      %p146 = por %p144, %p145
      %p148 = scmp.ne.s32.totalorder %s131, %s147
      %p149 = scmp.eq.s32.totalorder %s22, 0
      %p150 = por %p148, %p149
      %p151 = scmp.le.s32.totalorder 1, %s16
      %p152 = scmp.lt.s32.totalorder %s16, 3
      %p153 = pnand %p151, %p152
      %p154 = pneg %p153
      // Predicated region
      $region9: #{tpu_custom_call.1} parent=5 // pred_check
        _
      $region10: #{tpu_custom_call.1} parent=5 // pred_check_branch
        %156 = sbr.rel (%p153) target = $region12
      $region11: #{tpu_custom_call.1} parent=5 // pred_region
        %s157 = ssub.s32 %s16, 1
        // Predicated region
        $region13: #{tpu_custom_call.1} parent=11 // pred_check
          %p158 = pneg %p87
        $region14: #{tpu_custom_call.1} parent=11 // pred_check_branch
          %160 = sbr.rel (%p158) target = $region16
        $region15: #{tpu_custom_call.1} parent=11 // pred_region
          %s162 = ssub.s32 640, 640
          %163 = vsyncadd [#allocation7], %s162
          %s164 = smul.addr %s27, 128
          %s165 = scalar_lea.hbm %s1, %s164
          %s166 = sshll.u32 [#allocation6], 4
          %s167 = int_to_ptr.vmem [resolvable:$true] %s166
          %172 = dma.hbm_to_vmem [thread:$0]  %s165, 640, %s167, [#allocation7], 128, 128, 8
        $region16: #{tpu_custom_call.1} parent=11 // pred_fallthru
          _
        // Predicated region
        $region17: #{tpu_custom_call.1} parent=11 // pred_check
          %p173 = pneg %p113
        $region18: #{tpu_custom_call.1} parent=11 // pred_check_branch
          %175 = sbr.rel (%p173) target = $region20
        $region19: #{tpu_custom_call.1} parent=11 // pred_region
          %s177 = ssub.s32 16, 16
          %178 = vsyncadd [#allocation7], %s177
          %s179 = smul.addr %s27, 16
          %s180 = scalar_lea.hbm %s2, %s179
          %s182 = sshll.u32 [#allocation8], 4
          %s183 = int_to_ptr.vmem [resolvable:$true] %s182
          %185 = dma.hbm_to_vmem [thread:$0]  %s180, 16, %s183, [#allocation7]
        $region20: #{tpu_custom_call.1} parent=11 // pred_fallthru
          _
      $region12: #{tpu_custom_call.1} parent=5 // pred_fallthru
        _
      %p186 = scmp.lt.s32.totalorder %s16, 2
      // Predicated region
      $region21: #{tpu_custom_call.1} parent=5 // pred_check
        %p187 = pneg %p186
      $region22: #{tpu_custom_call.1} parent=5 // pred_check_branch
        %189 = sbr.rel (%p187) target = $region24
      $region23: #{tpu_custom_call.1} parent=5 // pred_region
        // Predicated region
        $region25: #{tpu_custom_call.1} parent=23 // pred_check
          %p190 = pneg %p55
        $region26: #{tpu_custom_call.1} parent=23 // pred_check_branch
          %192 = sbr.rel (%p190) target = $region28
        $region27: #{tpu_custom_call.1} parent=23 // pred_region
          %s193 = sand.u32 %s45, 1
          %s194 = scalar_lea.sflag [#allocation4], %s193
          %s195 = sand.u32 %s45, 1
          %s196 = smul.addr %s195, 432
          %s197 = scalar_lea.vmem [#allocation3], %s196
          %s199 = ssub.s32 6912, 6912
          %200 = vsyncadd %s194, %s199
          %s201 = smul.addr %s23, 54
          %s202 = smul.addr %s201, 128
          %s203 = scalar_lea.hbm %s0, %s202
          %s204 = sshll.u32 %s197, 4
          %s205 = int_to_ptr.vmem [resolvable:$true] %s204
          %210 = dma.hbm_to_vmem [thread:$0]  %s203, 6912, %s205, %s194, 128, 128, 8
        $region28: #{tpu_custom_call.1} parent=23 // pred_fallthru
          _
      $region24: #{tpu_custom_call.1} parent=5 // pred_fallthru
        _
      %p211 = scmp.le.s32.totalorder 1, %s16
      %p212 = scmp.lt.s32.totalorder %s16, 3
      %p213 = pnand %p211, %p212
      %p214 = pneg %p213
      // Predicated region
      $region29: #{tpu_custom_call.1} parent=5 // pred_check
        _
      $region30: #{tpu_custom_call.1} parent=5 // pred_check_branch
        %216 = sbr.rel (%p213) target = $region32
      $region31: #{tpu_custom_call.1} parent=5 // pred_region
        %s217 = ssub.s32 %s16, 1
        %s218 = sand.u32 %s48, 1
        %s219 = scalar_lea.sflag [#allocation4], %s218
        %s220 = sand.u32 %s48, 1
        %s221 = smul.addr %s220, 432
        %s222 = scalar_lea.vmem [#allocation3], %s221
        // Predicated region
        $region33: #{tpu_custom_call.1} parent=31 // pred_check
          %p223 = pneg %p61
        $region34: #{tpu_custom_call.1} parent=31 // pred_check_branch
          %225 = sbr.rel (%p223) target = $region36
        $region35: #{tpu_custom_call.1} parent=31 // pred_region
          %226 = dma.done %s219, 6912
        $region36: #{tpu_custom_call.1} parent=31 // pred_fallthru
          _
        // Predicated region
        $region37: #{tpu_custom_call.1} parent=31 // pred_check
          %p227 = pneg %p87
        $region38: #{tpu_custom_call.1} parent=31 // pred_check_branch
          %229 = sbr.rel (%p227) target = $region40
        $region39: #{tpu_custom_call.1} parent=31 // pred_region
          %230 = dma.done [#allocation7], 640
        $region40: #{tpu_custom_call.1} parent=31 // pred_fallthru
          _
        // Predicated region
        $region41: #{tpu_custom_call.1} parent=31 // pred_check
          %p231 = pneg %p113
        $region42: #{tpu_custom_call.1} parent=31 // pred_check_branch
          %233 = sbr.rel (%p231) target = $region44
        $region43: #{tpu_custom_call.1} parent=31 // pred_region
          %234 = dma.done [#allocation7], 16
        $region44: #{tpu_custom_call.1} parent=31 // pred_fallthru
          _
        %s235 = sand.u32 %s48, 1
        %s236 = scalar_lea.sflag [#allocation4], %s235
        %s237 = sand.u32 %s48, 1
        %s238 = smul.addr %s237, 432
        %s239 = scalar_lea.vmem [#allocation3], %s238
        %p240 = pneg %p61
        %p241 = pneg %p58
        %p242 = pneg %p87
        %p243 = pneg %p84
        %p244 = pneg %p113
        %p245 = pneg %p110
        %p246 = pneg %p143
        %p247 = pneg %p140
        %s248 = sand.u32 %s130, 1
        %s249 = scalar_lea.sflag [#allocation5], %s248
        %s250 = sand.u32 %s130, 1
        %s251 = smul.addr %s250, 256
        %s252 = scalar_lea.vmem [#allocation9], %s251
        %s253 = smul.u32 32, %s28
        %s254 = smul.u32 %s28, 16
        %s255 = smul.u32 %s254, 24
        %s256 = scalar_lea.vmem %s222, %s255 [#allocation3]
        %v257 = vld [vmem:[%s256] sm:$0xff]
        %v258 = vld [vmem:[%s256 + $0x8] sm:$0xff]
        %v259 = vld [vmem:[%s256 + $0x18] sm:$0xff]
        %v260 = vld [vmem:[%s256 + $0x20] sm:$0xff]
        %v261 = vld [vmem:[%s256 + $0x30] sm:$0xff]
        %v262 = vld [vmem:[%s256 + $0x38] sm:$0xff]
        %v263 = vld [vmem:[%s256 + $0x48] sm:$0xff]
        %v264 = vld [vmem:[%s256 + $0x50] sm:$0xff]
        %v265 = vld [vmem:[%s256 + $0x60] sm:$0xff]
        %v266 = vld [vmem:[%s256 + $0x68] sm:$0xff]
        %v267 = vld [vmem:[%s256 + $0x78] sm:$0xff]
        %v268 = vld [vmem:[%s256 + $0x80] sm:$0xff]
        %v269 = vld [vmem:[%s256 + $0x90] sm:$0xff]
        %v270 = vld [vmem:[%s256 + $0x98] sm:$0xff]
        %v271 = vld [vmem:[%s256 + $0xa8] sm:$0xff]
        %v272 = vld [vmem:[%s256 + $0xb0] sm:$0xff]
        %v273 = vld [vmem:[%s256 + $0xc0] sm:$0xff]
        %v274 = vld [vmem:[%s256 + $0xc8] sm:$0xff]
        %v275 = vld [vmem:[%s256 + $0xd8] sm:$0xff]
        %v276 = vld [vmem:[%s256 + $0xe0] sm:$0xff]
        %v277 = vld [vmem:[%s256 + $0xf0] sm:$0xff]
        %v278 = vld [vmem:[%s256 + $0xf8] sm:$0xff]
        %v279 = vld [vmem:[%s256 + $0x108] sm:$0xff]
        %v280 = vld [vmem:[%s256 + $0x110] sm:$0xff]
        %v281 = vld [vmem:[%s256 + $0x120] sm:$0xff]
        %v282 = vld [vmem:[%s256 + $0x128] sm:$0xff]
        %v283 = vld [vmem:[%s256 + $0x138] sm:$0xff]
        %v284 = vld [vmem:[%s256 + $0x140] sm:$0xff]
        %v285 = vld [vmem:[%s256 + $0x150] sm:$0xff]
        %v286 = vld [vmem:[%s256 + $0x158] sm:$0xff]
        %v287 = vld [vmem:[%s256 + $0x168] sm:$0xff]
        %v288 = vld [vmem:[%s256 + $0x170] sm:$0xff]
        %v289 = vld [vmem:[%s256 + $0x1] sm:$0xff]
        %v290 = vld [vmem:[%s256 + $0x9] sm:$0xff]
        %v291 = vld [vmem:[%s256 + $0x19] sm:$0xff]
        %v292 = vld [vmem:[%s256 + $0x21] sm:$0xff]
        %v293 = vld [vmem:[%s256 + $0x31] sm:$0xff]
        %v294 = vld [vmem:[%s256 + $0x39] sm:$0xff]
        %v295 = vld [vmem:[%s256 + $0x49] sm:$0xff]
        %v296 = vld [vmem:[%s256 + $0x51] sm:$0xff]
        %v297 = vld [vmem:[%s256 + $0x61] sm:$0xff]
        %v298 = vld [vmem:[%s256 + $0x69] sm:$0xff]
        %v299 = vld [vmem:[%s256 + $0x79] sm:$0xff]
        %v300 = vld [vmem:[%s256 + $0x81] sm:$0xff]
        %v301 = vld [vmem:[%s256 + $0x91] sm:$0xff]
        %v302 = vld [vmem:[%s256 + $0x99] sm:$0xff]
        %v303 = vld [vmem:[%s256 + $0xa9] sm:$0xff]
        %v304 = vld [vmem:[%s256 + $0xb1] sm:$0xff]
        %v305 = vld [vmem:[%s256 + $0xc1] sm:$0xff]
        %v306 = vld [vmem:[%s256 + $0xc9] sm:$0xff]
        %v307 = vld [vmem:[%s256 + $0xd9] sm:$0xff]
        %v308 = vld [vmem:[%s256 + $0xe1] sm:$0xff]
        %v309 = vld [vmem:[%s256 + $0xf1] sm:$0xff]
        %v310 = vld [vmem:[%s256 + $0xf9] sm:$0xff]
        %v311 = vld [vmem:[%s256 + $0x109] sm:$0xff]
        %v312 = vld [vmem:[%s256 + $0x111] sm:$0xff]
        %v313 = vld [vmem:[%s256 + $0x121] sm:$0xff]
        %v314 = vld [vmem:[%s256 + $0x129] sm:$0xff]
        %v315 = vld [vmem:[%s256 + $0x139] sm:$0xff]
        %v316 = vld [vmem:[%s256 + $0x141] sm:$0xff]
        %v317 = vld [vmem:[%s256 + $0x151] sm:$0xff]
        %v318 = vld [vmem:[%s256 + $0x159] sm:$0xff]
        %v319 = vld [vmem:[%s256 + $0x169] sm:$0xff]
        %v320 = vld [vmem:[%s256 + $0x171] sm:$0xff]
        %v321 = vld [vmem:[%s256 + $0x2] sm:$0xff]
        %v322 = vld [vmem:[%s256 + $0xa] sm:$0xff]
        %v323 = vld [vmem:[%s256 + $0x1a] sm:$0xff]
        %v324 = vld [vmem:[%s256 + $0x22] sm:$0xff]
        %v325 = vld [vmem:[%s256 + $0x32] sm:$0xff]
        %v326 = vld [vmem:[%s256 + $0x3a] sm:$0xff]
        %v327 = vld [vmem:[%s256 + $0x4a] sm:$0xff]
        %v328 = vld [vmem:[%s256 + $0x52] sm:$0xff]
        %v329 = vld [vmem:[%s256 + $0x62] sm:$0xff]
        %v330 = vld [vmem:[%s256 + $0x6a] sm:$0xff]
        %v331 = vld [vmem:[%s256 + $0x7a] sm:$0xff]
        %v332 = vld [vmem:[%s256 + $0x82] sm:$0xff]
        %v333 = vld [vmem:[%s256 + $0x92] sm:$0xff]
        %v334 = vld [vmem:[%s256 + $0x9a] sm:$0xff]
        %v335 = vld [vmem:[%s256 + $0xaa] sm:$0xff]
        %v336 = vld [vmem:[%s256 + $0xb2] sm:$0xff]
        %v337 = vld [vmem:[%s256 + $0xc2] sm:$0xff]
        %v338 = vld [vmem:[%s256 + $0xca] sm:$0xff]
        %v339 = vld [vmem:[%s256 + $0xda] sm:$0xff]
        %v340 = vld [vmem:[%s256 + $0xe2] sm:$0xff]
        %v341 = vld [vmem:[%s256 + $0xf2] sm:$0xff]
        %v342 = vld [vmem:[%s256 + $0xfa] sm:$0xff]
        %v343 = vld [vmem:[%s256 + $0x10a] sm:$0xff]
        %v344 = vld [vmem:[%s256 + $0x112] sm:$0xff]
        %v345 = vld [vmem:[%s256 + $0x122] sm:$0xff]
        %v346 = vld [vmem:[%s256 + $0x12a] sm:$0xff]
        %v347 = vld [vmem:[%s256 + $0x13a] sm:$0xff]
        %v348 = vld [vmem:[%s256 + $0x142] sm:$0xff]
        %v349 = vld [vmem:[%s256 + $0x152] sm:$0xff]
        %v350 = vld [vmem:[%s256 + $0x15a] sm:$0xff]
        %v351 = vld [vmem:[%s256 + $0x16a] sm:$0xff]
        %v352 = vld [vmem:[%s256 + $0x172] sm:$0xff]
        %385 = vrot.lane.b32.xlu0 %v289, 4
        %v386 = vpop.permute.xlu0 %385
        %387 = vrot.lane.b32.xlu0 %v290, 4
        %v388 = vpop.permute.xlu0 %387
        %389 = vrot.lane.b32.xlu0 %v291, 4
        %v390 = vpop.permute.xlu0 %389
        %391 = vrot.lane.b32.xlu0 %v292, 4
        %v392 = vpop.permute.xlu0 %391
        %393 = vrot.lane.b32.xlu0 %v293, 4
        %v394 = vpop.permute.xlu0 %393
        %395 = vrot.lane.b32.xlu0 %v294, 4
        %v396 = vpop.permute.xlu0 %395
        %397 = vrot.lane.b32.xlu0 %v295, 4
        %v398 = vpop.permute.xlu0 %397
        %399 = vrot.lane.b32.xlu0 %v296, 4
        %v400 = vpop.permute.xlu0 %399
        %401 = vrot.lane.b32.xlu0 %v297, 4
        %v402 = vpop.permute.xlu0 %401
        %403 = vrot.lane.b32.xlu0 %v298, 4
        %v404 = vpop.permute.xlu0 %403
        %405 = vrot.lane.b32.xlu0 %v299, 4
        %v406 = vpop.permute.xlu0 %405
        %407 = vrot.lane.b32.xlu0 %v300, 4
        %v408 = vpop.permute.xlu0 %407
        %409 = vrot.lane.b32.xlu0 %v301, 4
        %v410 = vpop.permute.xlu0 %409
        %411 = vrot.lane.b32.xlu0 %v302, 4
        %v412 = vpop.permute.xlu0 %411
        %413 = vrot.lane.b32.xlu0 %v303, 4
        %v414 = vpop.permute.xlu0 %413
        %415 = vrot.lane.b32.xlu0 %v304, 4
        %v416 = vpop.permute.xlu0 %415
        %417 = vrot.lane.b32.xlu0 %v305, 4
        %v418 = vpop.permute.xlu0 %417
        %419 = vrot.lane.b32.xlu0 %v306, 4
        %v420 = vpop.permute.xlu0 %419
        %421 = vrot.lane.b32.xlu0 %v307, 4
        %v422 = vpop.permute.xlu0 %421
        %423 = vrot.lane.b32.xlu0 %v308, 4
        %v424 = vpop.permute.xlu0 %423
        %425 = vrot.lane.b32.xlu0 %v309, 4
        %v426 = vpop.permute.xlu0 %425
        %427 = vrot.lane.b32.xlu0 %v310, 4
        %v428 = vpop.permute.xlu0 %427
        %429 = vrot.lane.b32.xlu0 %v311, 4
        %v430 = vpop.permute.xlu0 %429
        %431 = vrot.lane.b32.xlu0 %v312, 4
        %v432 = vpop.permute.xlu0 %431
        %433 = vrot.lane.b32.xlu0 %v313, 4
        %v434 = vpop.permute.xlu0 %433
        %435 = vrot.lane.b32.xlu0 %v314, 4
        %v436 = vpop.permute.xlu0 %435
        %437 = vrot.lane.b32.xlu0 %v315, 4
        %v438 = vpop.permute.xlu0 %437
        %439 = vrot.lane.b32.xlu0 %v316, 4
        %v440 = vpop.permute.xlu0 %439
        %441 = vrot.lane.b32.xlu0 %v317, 4
        %v442 = vpop.permute.xlu0 %441
        %443 = vrot.lane.b32.xlu0 %v318, 4
        %v444 = vpop.permute.xlu0 %443
        %445 = vrot.lane.b32.xlu0 %v319, 4
        %v446 = vpop.permute.xlu0 %445
        %447 = vrot.lane.b32.xlu0 %v320, 4
        %v448 = vpop.permute.xlu0 %447
        %513 = vrot.lane.b32.xlu0 %v321, 8
        %v514 = vpop.permute.xlu0 %513
        %515 = vrot.lane.b32.xlu0 %v322, 8
        %v516 = vpop.permute.xlu0 %515
        %517 = vrot.lane.b32.xlu0 %v323, 8
        %v518 = vpop.permute.xlu0 %517
        %519 = vrot.lane.b32.xlu0 %v324, 8
        %v520 = vpop.permute.xlu0 %519
        %521 = vrot.lane.b32.xlu0 %v325, 8
        %v522 = vpop.permute.xlu0 %521
        %523 = vrot.lane.b32.xlu0 %v326, 8
        %v524 = vpop.permute.xlu0 %523
        %525 = vrot.lane.b32.xlu0 %v327, 8
        %v526 = vpop.permute.xlu0 %525
        %527 = vrot.lane.b32.xlu0 %v328, 8
        %v528 = vpop.permute.xlu0 %527
        %529 = vrot.lane.b32.xlu0 %v329, 8
        %v530 = vpop.permute.xlu0 %529
        %531 = vrot.lane.b32.xlu0 %v330, 8
        %v532 = vpop.permute.xlu0 %531
        %533 = vrot.lane.b32.xlu0 %v331, 8
        %v534 = vpop.permute.xlu0 %533
        %535 = vrot.lane.b32.xlu0 %v332, 8
        %v536 = vpop.permute.xlu0 %535
        %537 = vrot.lane.b32.xlu0 %v333, 8
        %v538 = vpop.permute.xlu0 %537
        %539 = vrot.lane.b32.xlu0 %v334, 8
        %v540 = vpop.permute.xlu0 %539
        %541 = vrot.lane.b32.xlu0 %v335, 8
        %v542 = vpop.permute.xlu0 %541
        %543 = vrot.lane.b32.xlu0 %v336, 8
        %v544 = vpop.permute.xlu0 %543
        %545 = vrot.lane.b32.xlu0 %v337, 8
        %v546 = vpop.permute.xlu0 %545
        %547 = vrot.lane.b32.xlu0 %v338, 8
        %v548 = vpop.permute.xlu0 %547
        %549 = vrot.lane.b32.xlu0 %v339, 8
        %v550 = vpop.permute.xlu0 %549
        %551 = vrot.lane.b32.xlu0 %v340, 8
        %v552 = vpop.permute.xlu0 %551
        %553 = vrot.lane.b32.xlu0 %v341, 8
        %v554 = vpop.permute.xlu0 %553
        %555 = vrot.lane.b32.xlu0 %v342, 8
        %v556 = vpop.permute.xlu0 %555
        %557 = vrot.lane.b32.xlu0 %v343, 8
        %v558 = vpop.permute.xlu0 %557
        %559 = vrot.lane.b32.xlu0 %v344, 8
        %v560 = vpop.permute.xlu0 %559
        %561 = vrot.lane.b32.xlu0 %v345, 8
        %v562 = vpop.permute.xlu0 %561
        %563 = vrot.lane.b32.xlu0 %v346, 8
        %v564 = vpop.permute.xlu0 %563
        %565 = vrot.lane.b32.xlu0 %v347, 8
        %v566 = vpop.permute.xlu0 %565
        %567 = vrot.lane.b32.xlu0 %v348, 8
        %v568 = vpop.permute.xlu0 %567
        %569 = vrot.lane.b32.xlu0 %v349, 8
        %v570 = vpop.permute.xlu0 %569
        %571 = vrot.lane.b32.xlu0 %v350, 8
        %v572 = vpop.permute.xlu0 %571
        %573 = vrot.lane.b32.xlu0 %v351, 8
        %v574 = vpop.permute.xlu0 %573
        %575 = vrot.lane.b32.xlu0 %v352, 8
        %v576 = vpop.permute.xlu0 %575
        %vm609 = vcmask 31744
        %v610 = vsel %vm609, %v257, %v386
        %v611 = vsel %vm609, %v258, %v388
        %v612 = vsel %vm609, %v259, %v390
        %v613 = vsel %vm609, %v260, %v392
        %v614 = vsel %vm609, %v261, %v394
        %v615 = vsel %vm609, %v262, %v396
        %v616 = vsel %vm609, %v263, %v398
        %v617 = vsel %vm609, %v264, %v400
        %v618 = vsel %vm609, %v265, %v402
        %v619 = vsel %vm609, %v266, %v404
        %v620 = vsel %vm609, %v267, %v406
        %v621 = vsel %vm609, %v268, %v408
        %v622 = vsel %vm609, %v269, %v410
        %v623 = vsel %vm609, %v270, %v412
        %v624 = vsel %vm609, %v271, %v414
        %v625 = vsel %vm609, %v272, %v416
        %v626 = vsel %vm609, %v273, %v418
        %v627 = vsel %vm609, %v274, %v420
        %v628 = vsel %vm609, %v275, %v422
        %v629 = vsel %vm609, %v276, %v424
        %v630 = vsel %vm609, %v277, %v426
        %v631 = vsel %vm609, %v278, %v428
        %v632 = vsel %vm609, %v279, %v430
        %v633 = vsel %vm609, %v280, %v432
        %v634 = vsel %vm609, %v281, %v434
        %v635 = vsel %vm609, %v282, %v436
        %v636 = vsel %vm609, %v283, %v438
        %v637 = vsel %vm609, %v284, %v440
        %v638 = vsel %vm609, %v285, %v442
        %v639 = vsel %vm609, %v286, %v444
        %v640 = vsel %vm609, %v287, %v446
        %v641 = vsel %vm609, %v288, %v448
        %vm642 = vcmask 64512
        %v643 = vsel %vm642, %v610, %v514
        %v644 = vsel %vm642, %v611, %v516
        %v645 = vsel %vm642, %v612, %v518
        %v646 = vsel %vm642, %v613, %v520
        %v647 = vsel %vm642, %v614, %v522
        %v648 = vsel %vm642, %v615, %v524
        %v649 = vsel %vm642, %v616, %v526
        %v650 = vsel %vm642, %v617, %v528
        %v651 = vsel %vm642, %v618, %v530
        %v652 = vsel %vm642, %v619, %v532
        %v653 = vsel %vm642, %v620, %v534
        %v654 = vsel %vm642, %v621, %v536
        %v655 = vsel %vm642, %v622, %v538
        %v656 = vsel %vm642, %v623, %v540
        %v657 = vsel %vm642, %v624, %v542
        %v658 = vsel %vm642, %v625, %v544
        %v659 = vsel %vm642, %v626, %v546
        %v660 = vsel %vm642, %v627, %v548
        %v661 = vsel %vm642, %v628, %v550
        %v662 = vsel %vm642, %v629, %v552
        %v663 = vsel %vm642, %v630, %v554
        %v664 = vsel %vm642, %v631, %v556
        %v665 = vsel %vm642, %v632, %v558
        %v666 = vsel %vm642, %v633, %v560
        %v667 = vsel %vm642, %v634, %v562
        %v668 = vsel %vm642, %v635, %v564
        %v669 = vsel %vm642, %v636, %v566
        %v670 = vsel %vm642, %v637, %v568
        %v671 = vsel %vm642, %v638, %v570
        %v672 = vsel %vm642, %v639, %v572
        %v673 = vsel %vm642, %v640, %v574
        %v674 = vsel %vm642, %v641, %v576
        %v675 = vld [vmem:[#allocation6] sm:$0xff]
        %v676 = vld [vmem:[#allocation6 + $0x8] sm:$0xf]
        %v677 = vld [vmem:[#allocation8] sm:$0x1]
        %v679 = vlaneseq
        %v680 = vshrl.u32 %v679, 7
        %v681 = vsub.s32 0, %v680
        %v682 = vrot.slane %v677, %v681
        %vm684 = vcmask 97280
        %v686 = vsel %vm684, %v643, 0
        %v689 = vsel %vm684, %v644, 0
        %v692 = vsel %vm684, %v645, 0
        %v695 = vsel %vm684, %v646, 0
        %v698 = vsel %vm684, %v647, 0
        %v701 = vsel %vm684, %v648, 0
        %v704 = vsel %vm684, %v649, 0
        %v707 = vsel %vm684, %v650, 0
        %v710 = vsel %vm684, %v651, 0
        %v713 = vsel %vm684, %v652, 0
        %v716 = vsel %vm684, %v653, 0
        %v719 = vsel %vm684, %v654, 0
        %v722 = vsel %vm684, %v655, 0
        %v725 = vsel %vm684, %v656, 0
        %v728 = vsel %vm684, %v657, 0
        %v731 = vsel %vm684, %v658, 0
        %v734 = vsel %vm684, %v659, 0
        %v737 = vsel %vm684, %v660, 0
        %v740 = vsel %vm684, %v661, 0
        %v743 = vsel %vm684, %v662, 0
        %v746 = vsel %vm684, %v663, 0
        %v749 = vsel %vm684, %v664, 0
        %v752 = vsel %vm684, %v665, 0
        %v755 = vsel %vm684, %v666, 0
        %v758 = vsel %vm684, %v667, 0
        %v761 = vsel %vm684, %v668, 0
        %v764 = vsel %vm684, %v669, 0
        %v767 = vsel %vm684, %v670, 0
        %v770 = vsel %vm684, %v671, 0
        %v773 = vsel %vm684, %v672, 0
        %v776 = vsel %vm684, %v673, 0
        %v779 = vsel %vm684, %v674, 0
        %vm781 = vcmask 1043456
        %v783 = vsel %vm781, %v676, 0
        %785 = vmatprep.subr.mxu0 0.0
        %786 = vmatpush1.msra.mxu0 %v675
        %787 = vmatprep.subr.mxu0 0.0
        %788 = vmatpush1.msra.mxu0 %v783
        %789 = vmatprep.subr.mxu0 0.0
        %790 = vmatpush1.msra.mxu0 0.0
        %791 = vmatprep.subr.mxu0 0.0
        %792 = vmatpush1.msra.mxu0 0.0
        %793 = vmatprep.subr.mxu0 0.0
        %794 = vmatpush1.msra.mxu0 0.0
        %795 = vmatprep.subr.mxu0 0.0
        %796 = vmatpush1.msra.mxu0 0.0
        %797 = vmatprep.subr.mxu0 0.0
        %798 = vmatpush1.msra.mxu0 0.0
        %799 = vmatprep.subr.mxu0 0.0
        %800 = vmatpush1.msra.mxu0 0.0
        %801 = vmatprep.subr.mxu0 0.0
        %802 = vmatpush1.msra.mxu0 0.0
        %803 = vmatprep.subr.mxu0 0.0
        %804 = vmatpush1.msra.mxu0 0.0
        %805 = vmatprep.subr.mxu0 0.0
        %806 = vmatpush1.msra.mxu0 0.0
        %807 = vmatprep.subr.mxu0 0.0
        %808 = vmatpush1.msra.mxu0 0.0
        %809 = vmatprep.subr.mxu0 0.0
        %810 = vmatpush1.msra.mxu0 0.0
        %811 = vmatprep.subr.mxu0 0.0
        %812 = vmatpush1.msra.mxu0 0.0
        %813 = vmatprep.subr.mxu0 0.0
        %814 = vmatpush1.msra.mxu0 0.0
        %815 = vmatprep.subr.mxu0 0.0
        %816 = vmatpush1.msra.mxu0 0.0
        %817 = vmatprep.subr.mxu0 0.0
        %818 = vmatpush1.msra.mxu0 0.0
        %819 = vmatprep.subr.mxu0 0.0
        %820 = vmatpush1.msra.mxu0 0.0
        %821 = vmatprep.subr.mxu0 0.0
        %822 = vmatpush1.msra.mxu0 0.0
        %823 = vmatprep.subr.mxu0 0.0
        %824 = vmatpush1.msra.mxu0 0.0
        %825 = vmatprep.subr.mxu0 0.0
        %826 = vmatpush1.msra.mxu0 0.0
        %827 = vmatprep.subr.mxu0 0.0
        %828 = vmatpush1.msra.mxu0 0.0
        %829 = vmatprep.subr.mxu0 0.0
        %830 = vmatpush1.msra.mxu0 0.0
        %831 = vmatprep.subr.mxu0 0.0
        %832 = vmatpush1.msra.mxu0 0.0
        %833 = vmatprep.subr.mxu0 0.0
        %834 = vmatpush1.msra.mxu0 0.0
        %835 = vmatprep.subr.mxu0 0.0
        %836 = vmatpush1.msra.mxu0 0.0
        %837 = vmatprep.subr.mxu0 0.0
        %838 = vmatpush1.msra.mxu0 0.0
        %839 = vmatprep.subr.mxu0 0.0
        %840 = vmatpush1.msra.mxu0 0.0
        %841 = vmatprep.subr.mxu0 0.0
        %842 = vmatpush1.msra.mxu0 0.0
        %843 = vmatprep.subr.mxu0 0.0
        %844 = vmatpush1.msra.mxu0 0.0
        %845 = vmatprep.subr.mxu0 0.0
        %846 = vmatpush1.msra.mxu0 0.0
        %847 = vmatprep.subr.mxu0 0.0
        %848 = vmatpush1.msra.mxu0 0.0
        %849 = vmatprep.mubr.f32.mxu0 0.0
        %850 = vmatmul.mubr.f32.gmra.mrb[0].mxu0 %v686
        %v851 = vpop.f32.mrb[0].mxu0
        %v852 = vadd.f32 %v682, %v851
        %v853 = vpop.f32.mrb[0].mxu0
        %854 = vmatprep.mubr.f32.mxu0 0.0
        %855 = vmatmul.mubr.f32.gmra.mrb[0].mxu0 %v689
        %v856 = vpop.f32.mrb[0].mxu0
        %v857 = vadd.f32 %v682, %v856
        %v858 = vpop.f32.mrb[0].mxu0
        %859 = vmatprep.mubr.f32.mxu0 0.0
        %860 = vmatmul.mubr.f32.gmra.mrb[0].mxu0 %v692
        %v861 = vpop.f32.mrb[0].mxu0
        %v862 = vadd.f32 %v682, %v861
        %v863 = vpop.f32.mrb[0].mxu0
        %864 = vmatprep.mubr.f32.mxu0 0.0
        %865 = vmatmul.mubr.f32.gmra.mrb[0].mxu0 %v695
        %v866 = vpop.f32.mrb[0].mxu0
        %v867 = vadd.f32 %v682, %v866
        %v868 = vpop.f32.mrb[0].mxu0
        %869 = vmatprep.mubr.f32.mxu0 0.0
        %870 = vmatmul.mubr.f32.gmra.mrb[0].mxu0 %v698
        %v871 = vpop.f32.mrb[0].mxu0
        %v872 = vadd.f32 %v682, %v871
        %v873 = vpop.f32.mrb[0].mxu0
        %874 = vmatprep.mubr.f32.mxu0 0.0
        %875 = vmatmul.mubr.f32.gmra.mrb[0].mxu0 %v701
        %v876 = vpop.f32.mrb[0].mxu0
        %v877 = vadd.f32 %v682, %v876
        %v878 = vpop.f32.mrb[0].mxu0
        %879 = vmatprep.mubr.f32.mxu0 0.0
        %880 = vmatmul.mubr.f32.gmra.mrb[0].mxu0 %v704
        %v881 = vpop.f32.mrb[0].mxu0
        %v882 = vadd.f32 %v682, %v881
        %v883 = vpop.f32.mrb[0].mxu0
        %884 = vmatprep.mubr.f32.mxu0 0.0
        %885 = vmatmul.mubr.f32.gmra.mrb[0].mxu0 %v707
        %v886 = vpop.f32.mrb[0].mxu0
        %v887 = vadd.f32 %v682, %v886
        %v888 = vpop.f32.mrb[0].mxu0
        %889 = vmatprep.mubr.f32.mxu0 0.0
        %890 = vmatmul.mubr.f32.gmra.mrb[0].mxu0 %v710
        %v891 = vpop.f32.mrb[0].mxu0
        %v892 = vadd.f32 %v682, %v891
        %v893 = vpop.f32.mrb[0].mxu0
        %894 = vmatprep.mubr.f32.mxu0 0.0
        %895 = vmatmul.mubr.f32.gmra.mrb[0].mxu0 %v713
        %v896 = vpop.f32.mrb[0].mxu0
        %v897 = vadd.f32 %v682, %v896
        %v898 = vpop.f32.mrb[0].mxu0
        %899 = vmatprep.mubr.f32.mxu0 0.0
        %900 = vmatmul.mubr.f32.gmra.mrb[0].mxu0 %v716
        %v901 = vpop.f32.mrb[0].mxu0
        %v902 = vadd.f32 %v682, %v901
        %v903 = vpop.f32.mrb[0].mxu0
        %904 = vmatprep.mubr.f32.mxu0 0.0
        %905 = vmatmul.mubr.f32.gmra.mrb[0].mxu0 %v719
        %v906 = vpop.f32.mrb[0].mxu0
        %v907 = vadd.f32 %v682, %v906
        %v908 = vpop.f32.mrb[0].mxu0
        %909 = vmatprep.mubr.f32.mxu0 0.0
        %910 = vmatmul.mubr.f32.gmra.mrb[0].mxu0 %v722
        %v911 = vpop.f32.mrb[0].mxu0
        %v912 = vadd.f32 %v682, %v911
        %v913 = vpop.f32.mrb[0].mxu0
        %914 = vmatprep.mubr.f32.mxu0 0.0
        %915 = vmatmul.mubr.f32.gmra.mrb[0].mxu0 %v725
        %v916 = vpop.f32.mrb[0].mxu0
        %v917 = vadd.f32 %v682, %v916
        %v918 = vpop.f32.mrb[0].mxu0
        %919 = vmatprep.mubr.f32.mxu0 0.0
        %920 = vmatmul.mubr.f32.gmra.mrb[0].mxu0 %v728
        %v921 = vpop.f32.mrb[0].mxu0
        %v922 = vadd.f32 %v682, %v921
        %v923 = vpop.f32.mrb[0].mxu0
        %924 = vmatprep.mubr.f32.mxu0 0.0
        %925 = vmatmul.mubr.f32.gmra.mrb[0].mxu0 %v731
        %v926 = vpop.f32.mrb[0].mxu0
        %v927 = vadd.f32 %v682, %v926
        %v928 = vpop.f32.mrb[0].mxu0
        %929 = vmatprep.mubr.f32.mxu0 0.0
        %930 = vmatmul.mubr.f32.gmra.mrb[0].mxu0 %v734
        %v931 = vpop.f32.mrb[0].mxu0
        %v932 = vadd.f32 %v682, %v931
        %v933 = vpop.f32.mrb[0].mxu0
        %934 = vmatprep.mubr.f32.mxu0 0.0
        %935 = vmatmul.mubr.f32.gmra.mrb[0].mxu0 %v737
        %v936 = vpop.f32.mrb[0].mxu0
        %v937 = vadd.f32 %v682, %v936
        %v938 = vpop.f32.mrb[0].mxu0
        %939 = vmatprep.mubr.f32.mxu0 0.0
        %940 = vmatmul.mubr.f32.gmra.mrb[0].mxu0 %v740
        %v941 = vpop.f32.mrb[0].mxu0
        %v942 = vadd.f32 %v682, %v941
        %v943 = vpop.f32.mrb[0].mxu0
        %944 = vmatprep.mubr.f32.mxu0 0.0
        %945 = vmatmul.mubr.f32.gmra.mrb[0].mxu0 %v743
        %v946 = vpop.f32.mrb[0].mxu0
        %v947 = vadd.f32 %v682, %v946
        %v948 = vpop.f32.mrb[0].mxu0
        %949 = vmatprep.mubr.f32.mxu0 0.0
        %950 = vmatmul.mubr.f32.gmra.mrb[0].mxu0 %v746
        %v951 = vpop.f32.mrb[0].mxu0
        %v952 = vadd.f32 %v682, %v951
        %v953 = vpop.f32.mrb[0].mxu0
        %954 = vmatprep.mubr.f32.mxu0 0.0
        %955 = vmatmul.mubr.f32.gmra.mrb[0].mxu0 %v749
        %v956 = vpop.f32.mrb[0].mxu0
        %v957 = vadd.f32 %v682, %v956
        %v958 = vpop.f32.mrb[0].mxu0
        %959 = vmatprep.mubr.f32.mxu0 0.0
        %960 = vmatmul.mubr.f32.gmra.mrb[0].mxu0 %v752
        %v961 = vpop.f32.mrb[0].mxu0
        %v962 = vadd.f32 %v682, %v961
        %v963 = vpop.f32.mrb[0].mxu0
        %964 = vmatprep.mubr.f32.mxu0 0.0
        %965 = vmatmul.mubr.f32.gmra.mrb[0].mxu0 %v755
        %v966 = vpop.f32.mrb[0].mxu0
        %v967 = vadd.f32 %v682, %v966
        %v968 = vpop.f32.mrb[0].mxu0
        %969 = vmatprep.mubr.f32.mxu0 0.0
        %970 = vmatmul.mubr.f32.gmra.mrb[0].mxu0 %v758
        %v971 = vpop.f32.mrb[0].mxu0
        %v972 = vadd.f32 %v682, %v971
        %v973 = vpop.f32.mrb[0].mxu0
        %974 = vmatprep.mubr.f32.mxu0 0.0
        %975 = vmatmul.mubr.f32.gmra.mrb[0].mxu0 %v761
        %v976 = vpop.f32.mrb[0].mxu0
        %v977 = vadd.f32 %v682, %v976
        %v978 = vpop.f32.mrb[0].mxu0
        %979 = vmatprep.mubr.f32.mxu0 0.0
        %980 = vmatmul.mubr.f32.gmra.mrb[0].mxu0 %v764
        %v981 = vpop.f32.mrb[0].mxu0
        %v982 = vadd.f32 %v682, %v981
        %v983 = vpop.f32.mrb[0].mxu0
        %984 = vmatprep.mubr.f32.mxu0 0.0
        %985 = vmatmul.mubr.f32.gmra.mrb[0].mxu0 %v767
        %v986 = vpop.f32.mrb[0].mxu0
        %v987 = vadd.f32 %v682, %v986
        %v988 = vpop.f32.mrb[0].mxu0
        %989 = vmatprep.mubr.f32.mxu0 0.0
        %990 = vmatmul.mubr.f32.gmra.mrb[0].mxu0 %v770
        %v991 = vpop.f32.mrb[0].mxu0
        %v992 = vadd.f32 %v682, %v991
        %v993 = vpop.f32.mrb[0].mxu0
        %994 = vmatprep.mubr.f32.mxu0 0.0
        %995 = vmatmul.mubr.f32.gmra.mrb[0].mxu0 %v773
        %v996 = vpop.f32.mrb[0].mxu0
        %v997 = vadd.f32 %v682, %v996
        %v998 = vpop.f32.mrb[0].mxu0
        %999 = vmatprep.mubr.f32.mxu0 0.0
        %1000 = vmatmul.mubr.f32.gmra.mrb[0].mxu0 %v776
        %v1001 = vpop.f32.mrb[0].mxu0
        %v1002 = vadd.f32 %v682, %v1001
        %v1003 = vpop.f32.mrb[0].mxu0
        %1004 = vmatprep.mubr.f32.mxu0 0.0
        %1005 = vmatmul.mubr.f32.gmra.mrb[0].mxu0 %v779
        %v1006 = vpop.f32.mrb[0].mxu0
        %v1007 = vadd.f32 %v682, %v1006
        %v1008 = vpop.f32.mrb[0].mxu0
        %1009 = vdwg.mxu0
        %1010 = vst [vmem:[#allocation2] sm:$0xff] %v852
        %1011 = vst [vmem:[#allocation2 + $0x8] sm:$0xff] %v857
        %1012 = vst [vmem:[#allocation2 + $0x10] sm:$0xff] %v862
        %1013 = vst [vmem:[#allocation2 + $0x18] sm:$0xff] %v867
        %1014 = vst [vmem:[#allocation2 + $0x20] sm:$0xff] %v872
        %1015 = vst [vmem:[#allocation2 + $0x28] sm:$0xff] %v877
        %1016 = vst [vmem:[#allocation2 + $0x30] sm:$0xff] %v882
        %1017 = vst [vmem:[#allocation2 + $0x38] sm:$0xff] %v887
        %1018 = vst [vmem:[#allocation2 + $0x40] sm:$0xff] %v892
        %1019 = vst [vmem:[#allocation2 + $0x48] sm:$0xff] %v897
        %1020 = vst [vmem:[#allocation2 + $0x50] sm:$0xff] %v902
        %1021 = vst [vmem:[#allocation2 + $0x58] sm:$0xff] %v907
        %1022 = vst [vmem:[#allocation2 + $0x60] sm:$0xff] %v912
        %1023 = vst [vmem:[#allocation2 + $0x68] sm:$0xff] %v917
        %1024 = vst [vmem:[#allocation2 + $0x70] sm:$0xff] %v922
        %1025 = vst [vmem:[#allocation2 + $0x78] sm:$0xff] %v927
        %1026 = vst [vmem:[#allocation2 + $0x80] sm:$0xff] %v932
        %1027 = vst [vmem:[#allocation2 + $0x88] sm:$0xff] %v937
        %1028 = vst [vmem:[#allocation2 + $0x90] sm:$0xff] %v942
        %1029 = vst [vmem:[#allocation2 + $0x98] sm:$0xff] %v947
        %1030 = vst [vmem:[#allocation2 + $0xa0] sm:$0xff] %v952
        %1031 = vst [vmem:[#allocation2 + $0xa8] sm:$0xff] %v957
        %1032 = vst [vmem:[#allocation2 + $0xb0] sm:$0xff] %v962
        %1033 = vst [vmem:[#allocation2 + $0xb8] sm:$0xff] %v967
        %1034 = vst [vmem:[#allocation2 + $0xc0] sm:$0xff] %v972
        %1035 = vst [vmem:[#allocation2 + $0xc8] sm:$0xff] %v977
        %1036 = vst [vmem:[#allocation2 + $0xd0] sm:$0xff] %v982
        %1037 = vst [vmem:[#allocation2 + $0xd8] sm:$0xff] %v987
        %1038 = vst [vmem:[#allocation2 + $0xe0] sm:$0xff] %v992
        %1039 = vst [vmem:[#allocation2 + $0xe8] sm:$0xff] %v997
        %1040 = vst [vmem:[#allocation2 + $0xf0] sm:$0xff] %v1002
        %1041 = vst [vmem:[#allocation2 + $0xf8] sm:$0xff] %v1007
        %s1042 = sadd.s32 %s254, 1
        %s1043 = smul.u32 %s1042, 24
        %s1044 = scalar_lea.vmem %s222, %s1043 [#allocation3]
        %v1045 = vld [vmem:[%s1044] sm:$0xff]
        %v1046 = vld [vmem:[%s1044 + $0x8] sm:$0xff]
        %v1047 = vld [vmem:[%s1044 + $0x18] sm:$0xff]
        %v1048 = vld [vmem:[%s1044 + $0x20] sm:$0xff]
        %v1049 = vld [vmem:[%s1044 + $0x30] sm:$0xff]
        %v1050 = vld [vmem:[%s1044 + $0x38] sm:$0xff]
        %v1051 = vld [vmem:[%s1044 + $0x48] sm:$0xff]
        %v1052 = vld [vmem:[%s1044 + $0x50] sm:$0xff]
        %v1053 = vld [vmem:[%s1044 + $0x60] sm:$0xff]
        %v1054 = vld [vmem:[%s1044 + $0x68] sm:$0xff]
        %v1055 = vld [vmem:[%s1044 + $0x78] sm:$0xff]
        %v1056 = vld [vmem:[%s1044 + $0x80] sm:$0xff]
        %v1057 = vld [vmem:[%s1044 + $0x90] sm:$0xff]
        %v1058 = vld [vmem:[%s1044 + $0x98] sm:$0xff]
        %v1059 = vld [vmem:[%s1044 + $0xa8] sm:$0xff]
        %v1060 = vld [vmem:[%s1044 + $0xb0] sm:$0xff]
        %v1061 = vld [vmem:[%s1044 + $0xc0] sm:$0xff]
        %v1062 = vld [vmem:[%s1044 + $0xc8] sm:$0xff]
        %v1063 = vld [vmem:[%s1044 + $0xd8] sm:$0xff]
        %v1064 = vld [vmem:[%s1044 + $0xe0] sm:$0xff]
        %v1065 = vld [vmem:[%s1044 + $0xf0] sm:$0xff]
        %v1066 = vld [vmem:[%s1044 + $0xf8] sm:$0xff]
        %v1067 = vld [vmem:[%s1044 + $0x108] sm:$0xff]
        %v1068 = vld [vmem:[%s1044 + $0x110] sm:$0xff]
        %v1069 = vld [vmem:[%s1044 + $0x120] sm:$0xff]
        %v1070 = vld [vmem:[%s1044 + $0x128] sm:$0xff]
        %v1071 = vld [vmem:[%s1044 + $0x138] sm:$0xff]
        %v1072 = vld [vmem:[%s1044 + $0x140] sm:$0xff]
        %v1073 = vld [vmem:[%s1044 + $0x150] sm:$0xff]
        %v1074 = vld [vmem:[%s1044 + $0x158] sm:$0xff]
        %v1075 = vld [vmem:[%s1044 + $0x168] sm:$0xff]
        %v1076 = vld [vmem:[%s1044 + $0x170] sm:$0xff]
        %v1077 = vld [vmem:[%s1044 + $0x1] sm:$0xff]
        %v1078 = vld [vmem:[%s1044 + $0x9] sm:$0xff]
        %v1079 = vld [vmem:[%s1044 + $0x19] sm:$0xff]
        %v1080 = vld [vmem:[%s1044 + $0x21] sm:$0xff]
        %v1081 = vld [vmem:[%s1044 + $0x31] sm:$0xff]
        %v1082 = vld [vmem:[%s1044 + $0x39] sm:$0xff]
        %v1083 = vld [vmem:[%s1044 + $0x49] sm:$0xff]
        %v1084 = vld [vmem:[%s1044 + $0x51] sm:$0xff]
        %v1085 = vld [vmem:[%s1044 + $0x61] sm:$0xff]
        %v1086 = vld [vmem:[%s1044 + $0x69] sm:$0xff]
        %v1087 = vld [vmem:[%s1044 + $0x79] sm:$0xff]
        %v1088 = vld [vmem:[%s1044 + $0x81] sm:$0xff]
        %v1089 = vld [vmem:[%s1044 + $0x91] sm:$0xff]
        %v1090 = vld [vmem:[%s1044 + $0x99] sm:$0xff]
        %v1091 = vld [vmem:[%s1044 + $0xa9] sm:$0xff]
        %v1092 = vld [vmem:[%s1044 + $0xb1] sm:$0xff]
        %v1093 = vld [vmem:[%s1044 + $0xc1] sm:$0xff]
        %v1094 = vld [vmem:[%s1044 + $0xc9] sm:$0xff]
        %v1095 = vld [vmem:[%s1044 + $0xd9] sm:$0xff]
        %v1096 = vld [vmem:[%s1044 + $0xe1] sm:$0xff]
        %v1097 = vld [vmem:[%s1044 + $0xf1] sm:$0xff]
        %v1098 = vld [vmem:[%s1044 + $0xf9] sm:$0xff]
        %v1099 = vld [vmem:[%s1044 + $0x109] sm:$0xff]
        %v1100 = vld [vmem:[%s1044 + $0x111] sm:$0xff]
        %v1101 = vld [vmem:[%s1044 + $0x121] sm:$0xff]
        %v1102 = vld [vmem:[%s1044 + $0x129] sm:$0xff]
        %v1103 = vld [vmem:[%s1044 + $0x139] sm:$0xff]
        %v1104 = vld [vmem:[%s1044 + $0x141] sm:$0xff]
        %v1105 = vld [vmem:[%s1044 + $0x151] sm:$0xff]
        %v1106 = vld [vmem:[%s1044 + $0x159] sm:$0xff]
        %v1107 = vld [vmem:[%s1044 + $0x169] sm:$0xff]
        %v1108 = vld [vmem:[%s1044 + $0x171] sm:$0xff]
        %v1109 = vld [vmem:[%s1044 + $0x2] sm:$0xff]
        %v1110 = vld [vmem:[%s1044 + $0xa] sm:$0xff]
        %v1111 = vld [vmem:[%s1044 + $0x1a] sm:$0xff]
        %v1112 = vld [vmem:[%s1044 + $0x22] sm:$0xff]
        %v1113 = vld [vmem:[%s1044 + $0x32] sm:$0xff]
        %v1114 = vld [vmem:[%s1044 + $0x3a] sm:$0xff]
        %v1115 = vld [vmem:[%s1044 + $0x4a] sm:$0xff]
        %v1116 = vld [vmem:[%s1044 + $0x52] sm:$0xff]
        %v1117 = vld [vmem:[%s1044 + $0x62] sm:$0xff]
        %v1118 = vld [vmem:[%s1044 + $0x6a] sm:$0xff]
        %v1119 = vld [vmem:[%s1044 + $0x7a] sm:$0xff]
        %v1120 = vld [vmem:[%s1044 + $0x82] sm:$0xff]
        %v1121 = vld [vmem:[%s1044 + $0x92] sm:$0xff]
        %v1122 = vld [vmem:[%s1044 + $0x9a] sm:$0xff]
        %v1123 = vld [vmem:[%s1044 + $0xaa] sm:$0xff]
        %v1124 = vld [vmem:[%s1044 + $0xb2] sm:$0xff]
        %v1125 = vld [vmem:[%s1044 + $0xc2] sm:$0xff]
        %v1126 = vld [vmem:[%s1044 + $0xca] sm:$0xff]
        %v1127 = vld [vmem:[%s1044 + $0xda] sm:$0xff]
        %v1128 = vld [vmem:[%s1044 + $0xe2] sm:$0xff]
        %v1129 = vld [vmem:[%s1044 + $0xf2] sm:$0xff]
        %v1130 = vld [vmem:[%s1044 + $0xfa] sm:$0xff]
        %v1131 = vld [vmem:[%s1044 + $0x10a] sm:$0xff]
        %v1132 = vld [vmem:[%s1044 + $0x112] sm:$0xff]
        %v1133 = vld [vmem:[%s1044 + $0x122] sm:$0xff]
        %v1134 = vld [vmem:[%s1044 + $0x12a] sm:$0xff]
        %v1135 = vld [vmem:[%s1044 + $0x13a] sm:$0xff]
        %v1136 = vld [vmem:[%s1044 + $0x142] sm:$0xff]
        %v1137 = vld [vmem:[%s1044 + $0x152] sm:$0xff]
        %v1138 = vld [vmem:[%s1044 + $0x15a] sm:$0xff]
        %v1139 = vld [vmem:[%s1044 + $0x16a] sm:$0xff]
        %v1140 = vld [vmem:[%s1044 + $0x172] sm:$0xff]
        %1173 = vrot.lane.b32.xlu0 %v1077, 4
        %v1174 = vpop.permute.xlu0 %1173
        %1175 = vrot.lane.b32.xlu0 %v1078, 4
        %v1176 = vpop.permute.xlu0 %1175
        %1177 = vrot.lane.b32.xlu0 %v1079, 4
        %v1178 = vpop.permute.xlu0 %1177
        %1179 = vrot.lane.b32.xlu0 %v1080, 4
        %v1180 = vpop.permute.xlu0 %1179
        %1181 = vrot.lane.b32.xlu0 %v1081, 4
        %v1182 = vpop.permute.xlu0 %1181
        %1183 = vrot.lane.b32.xlu0 %v1082, 4
        %v1184 = vpop.permute.xlu0 %1183
        %1185 = vrot.lane.b32.xlu0 %v1083, 4
        %v1186 = vpop.permute.xlu0 %1185
        %1187 = vrot.lane.b32.xlu0 %v1084, 4
        %v1188 = vpop.permute.xlu0 %1187
        %1189 = vrot.lane.b32.xlu0 %v1085, 4
        %v1190 = vpop.permute.xlu0 %1189
        %1191 = vrot.lane.b32.xlu0 %v1086, 4
        %v1192 = vpop.permute.xlu0 %1191
        %1193 = vrot.lane.b32.xlu0 %v1087, 4
        %v1194 = vpop.permute.xlu0 %1193
        %1195 = vrot.lane.b32.xlu0 %v1088, 4
        %v1196 = vpop.permute.xlu0 %1195
        %1197 = vrot.lane.b32.xlu0 %v1089, 4
        %v1198 = vpop.permute.xlu0 %1197
        %1199 = vrot.lane.b32.xlu0 %v1090, 4
        %v1200 = vpop.permute.xlu0 %1199
        %1201 = vrot.lane.b32.xlu0 %v1091, 4
        %v1202 = vpop.permute.xlu0 %1201
        %1203 = vrot.lane.b32.xlu0 %v1092, 4
        %v1204 = vpop.permute.xlu0 %1203
        %1205 = vrot.lane.b32.xlu0 %v1093, 4
        %v1206 = vpop.permute.xlu0 %1205
        %1207 = vrot.lane.b32.xlu0 %v1094, 4
        %v1208 = vpop.permute.xlu0 %1207
        %1209 = vrot.lane.b32.xlu0 %v1095, 4
        %v1210 = vpop.permute.xlu0 %1209
        %1211 = vrot.lane.b32.xlu0 %v1096, 4
        %v1212 = vpop.permute.xlu0 %1211
        %1213 = vrot.lane.b32.xlu0 %v1097, 4
        %v1214 = vpop.permute.xlu0 %1213
        %1215 = vrot.lane.b32.xlu0 %v1098, 4
        %v1216 = vpop.permute.xlu0 %1215
        %1217 = vrot.lane.b32.xlu0 %v1099, 4
        %v1218 = vpop.permute.xlu0 %1217
        %1219 = vrot.lane.b32.xlu0 %v1100, 4
        %v1220 = vpop.permute.xlu0 %1219
        %1221 = vrot.lane.b32.xlu0 %v1101, 4
        %v1222 = vpop.permute.xlu0 %1221
        %1223 = vrot.lane.b32.xlu0 %v1102, 4
        %v1224 = vpop.permute.xlu0 %1223
        %1225 = vrot.lane.b32.xlu0 %v1103, 4
        %v1226 = vpop.permute.xlu0 %1225
        %1227 = vrot.lane.b32.xlu0 %v1104, 4
        %v1228 = vpop.permute.xlu0 %1227
        %1229 = vrot.lane.b32.xlu0 %v1105, 4
        %v1230 = vpop.permute.xlu0 %1229
        %1231 = vrot.lane.b32.xlu0 %v1106, 4
        %v1232 = vpop.permute.xlu0 %1231
        %1233 = vrot.lane.b32.xlu0 %v1107, 4
        %v1234 = vpop.permute.xlu0 %1233
        %1235 = vrot.lane.b32.xlu0 %v1108, 4
        %v1236 = vpop.permute.xlu0 %1235
        %1301 = vrot.lane.b32.xlu0 %v1109, 8
        %v1302 = vpop.permute.xlu0 %1301
        %1303 = vrot.lane.b32.xlu0 %v1110, 8
        %v1304 = vpop.permute.xlu0 %1303
        %1305 = vrot.lane.b32.xlu0 %v1111, 8
        %v1306 = vpop.permute.xlu0 %1305
        %1307 = vrot.lane.b32.xlu0 %v1112, 8
        %v1308 = vpop.permute.xlu0 %1307
        %1309 = vrot.lane.b32.xlu0 %v1113, 8
        %v1310 = vpop.permute.xlu0 %1309
        %1311 = vrot.lane.b32.xlu0 %v1114, 8
        %v1312 = vpop.permute.xlu0 %1311
        %1313 = vrot.lane.b32.xlu0 %v1115, 8
        %v1314 = vpop.permute.xlu0 %1313
        %1315 = vrot.lane.b32.xlu0 %v1116, 8
        %v1316 = vpop.permute.xlu0 %1315
        %1317 = vrot.lane.b32.xlu0 %v1117, 8
        %v1318 = vpop.permute.xlu0 %1317
        %1319 = vrot.lane.b32.xlu0 %v1118, 8
        %v1320 = vpop.permute.xlu0 %1319
        %1321 = vrot.lane.b32.xlu0 %v1119, 8
        %v1322 = vpop.permute.xlu0 %1321
        %1323 = vrot.lane.b32.xlu0 %v1120, 8
        %v1324 = vpop.permute.xlu0 %1323
        %1325 = vrot.lane.b32.xlu0 %v1121, 8
        %v1326 = vpop.permute.xlu0 %1325
        %1327 = vrot.lane.b32.xlu0 %v1122, 8
        %v1328 = vpop.permute.xlu0 %1327
        %1329 = vrot.lane.b32.xlu0 %v1123, 8
        %v1330 = vpop.permute.xlu0 %1329
        %1331 = vrot.lane.b32.xlu0 %v1124, 8
        %v1332 = vpop.permute.xlu0 %1331
        %1333 = vrot.lane.b32.xlu0 %v1125, 8
        %v1334 = vpop.permute.xlu0 %1333
        %1335 = vrot.lane.b32.xlu0 %v1126, 8
        %v1336 = vpop.permute.xlu0 %1335
        %1337 = vrot.lane.b32.xlu0 %v1127, 8
        %v1338 = vpop.permute.xlu0 %1337
        %1339 = vrot.lane.b32.xlu0 %v1128, 8
        %v1340 = vpop.permute.xlu0 %1339
        %1341 = vrot.lane.b32.xlu0 %v1129, 8
        %v1342 = vpop.permute.xlu0 %1341
        %1343 = vrot.lane.b32.xlu0 %v1130, 8
        %v1344 = vpop.permute.xlu0 %1343
        %1345 = vrot.lane.b32.xlu0 %v1131, 8
        %v1346 = vpop.permute.xlu0 %1345
        %1347 = vrot.lane.b32.xlu0 %v1132, 8
        %v1348 = vpop.permute.xlu0 %1347
        %1349 = vrot.lane.b32.xlu0 %v1133, 8
        %v1350 = vpop.permute.xlu0 %1349
        %1351 = vrot.lane.b32.xlu0 %v1134, 8
        %v1352 = vpop.permute.xlu0 %1351
        %1353 = vrot.lane.b32.xlu0 %v1135, 8
        %v1354 = vpop.permute.xlu0 %1353
        %1355 = vrot.lane.b32.xlu0 %v1136, 8
        %v1356 = vpop.permute.xlu0 %1355
        %1357 = vrot.lane.b32.xlu0 %v1137, 8
        %v1358 = vpop.permute.xlu0 %1357
        %1359 = vrot.lane.b32.xlu0 %v1138, 8
        %v1360 = vpop.permute.xlu0 %1359
        %1361 = vrot.lane.b32.xlu0 %v1139, 8
        %v1362 = vpop.permute.xlu0 %1361
        %1363 = vrot.lane.b32.xlu0 %v1140, 8
        %v1364 = vpop.permute.xlu0 %1363
        %v1397 = vsel %vm609, %v1045, %v1174
        %v1398 = vsel %vm609, %v1046, %v1176
        %v1399 = vsel %vm609, %v1047, %v1178
        %v1400 = vsel %vm609, %v1048, %v1180
        %v1401 = vsel %vm609, %v1049, %v1182
        %v1402 = vsel %vm609, %v1050, %v1184
        %v1403 = vsel %vm609, %v1051, %v1186
        %v1404 = vsel %vm609, %v1052, %v1188
        %v1405 = vsel %vm609, %v1053, %v1190
        %v1406 = vsel %vm609, %v1054, %v1192
        %v1407 = vsel %vm609, %v1055, %v1194
        %v1408 = vsel %vm609, %v1056, %v1196
        %v1409 = vsel %vm609, %v1057, %v1198
        %v1410 = vsel %vm609, %v1058, %v1200
        %v1411 = vsel %vm609, %v1059, %v1202
        %v1412 = vsel %vm609, %v1060, %v1204
        %v1413 = vsel %vm609, %v1061, %v1206
        %v1414 = vsel %vm609, %v1062, %v1208
        %v1415 = vsel %vm609, %v1063, %v1210
        %v1416 = vsel %vm609, %v1064, %v1212
        %v1417 = vsel %vm609, %v1065, %v1214
        %v1418 = vsel %vm609, %v1066, %v1216
        %v1419 = vsel %vm609, %v1067, %v1218
        %v1420 = vsel %vm609, %v1068, %v1220
        %v1421 = vsel %vm609, %v1069, %v1222
        %v1422 = vsel %vm609, %v1070, %v1224
        %v1423 = vsel %vm609, %v1071, %v1226
        %v1424 = vsel %vm609, %v1072, %v1228
        %v1425 = vsel %vm609, %v1073, %v1230
        %v1426 = vsel %vm609, %v1074, %v1232
        %v1427 = vsel %vm609, %v1075, %v1234
        %v1428 = vsel %vm609, %v1076, %v1236
        %v1429 = vsel %vm642, %v1397, %v1302
        %v1430 = vsel %vm642, %v1398, %v1304
        %v1431 = vsel %vm642, %v1399, %v1306
        %v1432 = vsel %vm642, %v1400, %v1308
        %v1433 = vsel %vm642, %v1401, %v1310
        %v1434 = vsel %vm642, %v1402, %v1312
        %v1435 = vsel %vm642, %v1403, %v1314
        %v1436 = vsel %vm642, %v1404, %v1316
        %v1437 = vsel %vm642, %v1405, %v1318
        %v1438 = vsel %vm642, %v1406, %v1320
        %v1439 = vsel %vm642, %v1407, %v1322
        %v1440 = vsel %vm642, %v1408, %v1324
        %v1441 = vsel %vm642, %v1409, %v1326
        %v1442 = vsel %vm642, %v1410, %v1328
        %v1443 = vsel %vm642, %v1411, %v1330
        %v1444 = vsel %vm642, %v1412, %v1332
        %v1445 = vsel %vm642, %v1413, %v1334
        %v1446 = vsel %vm642, %v1414, %v1336
        %v1447 = vsel %vm642, %v1415, %v1338
        %v1448 = vsel %vm642, %v1416, %v1340
        %v1449 = vsel %vm642, %v1417, %v1342
        %v1450 = vsel %vm642, %v1418, %v1344
        %v1451 = vsel %vm642, %v1419, %v1346
        %v1452 = vsel %vm642, %v1420, %v1348
        %v1453 = vsel %vm642, %v1421, %v1350
        %v1454 = vsel %vm642, %v1422, %v1352
        %v1455 = vsel %vm642, %v1423, %v1354
        %v1456 = vsel %vm642, %v1424, %v1356
        %v1457 = vsel %vm642, %v1425, %v1358
        %v1458 = vsel %vm642, %v1426, %v1360
        %v1459 = vsel %vm642, %v1427, %v1362
        %v1460 = vsel %vm642, %v1428, %v1364
        %v1461 = vld [vmem:[#allocation6 + $0xc] sm:$0xff]
        %v1462 = vld [vmem:[#allocation6 + $0x14] sm:$0xf]
        %v1464 = vsel %vm684, %v1429, 0
        %v1467 = vsel %vm684, %v1430, 0
        %v1470 = vsel %vm684, %v1431, 0
        %v1473 = vsel %vm684, %v1432, 0
        %v1476 = vsel %vm684, %v1433, 0
        %v1479 = vsel %vm684, %v1434, 0
        %v1482 = vsel %vm684, %v1435, 0
        %v1485 = vsel %vm684, %v1436, 0
        %v1488 = vsel %vm684, %v1437, 0
        %v1491 = vsel %vm684, %v1438, 0
        %v1494 = vsel %vm684, %v1439, 0
        %v1497 = vsel %vm684, %v1440, 0
        %v1500 = vsel %vm684, %v1441, 0
        %v1503 = vsel %vm684, %v1442, 0
        %v1506 = vsel %vm684, %v1443, 0
        %v1509 = vsel %vm684, %v1444, 0
        %v1512 = vsel %vm684, %v1445, 0
        %v1515 = vsel %vm684, %v1446, 0
        %v1518 = vsel %vm684, %v1447, 0
        %v1521 = vsel %vm684, %v1448, 0
        %v1524 = vsel %vm684, %v1449, 0
        %v1527 = vsel %vm684, %v1450, 0
        %v1530 = vsel %vm684, %v1451, 0
        %v1533 = vsel %vm684, %v1452, 0
        %v1536 = vsel %vm684, %v1453, 0
        %v1539 = vsel %vm684, %v1454, 0
        %v1542 = vsel %vm684, %v1455, 0
        %v1545 = vsel %vm684, %v1456, 0
        %v1548 = vsel %vm684, %v1457, 0
        %v1551 = vsel %vm684, %v1458, 0
        %v1554 = vsel %vm684, %v1459, 0
        %v1557 = vsel %vm684, %v1460, 0
        %v1560 = vsel %vm781, %v1462, 0
        %1562 = vmatprep.subr.mxu0 0.0
        %1563 = vmatpush1.msra.mxu0 %v1461
        %1564 = vmatprep.subr.mxu0 0.0
        %1565 = vmatpush1.msra.mxu0 %v1560
        %1566 = vmatprep.subr.mxu0 0.0
        %1567 = vmatpush1.msra.mxu0 0.0
        %1568 = vmatprep.subr.mxu0 0.0
        %1569 = vmatpush1.msra.mxu0 0.0
        %1570 = vmatprep.subr.mxu0 0.0
        %1571 = vmatpush1.msra.mxu0 0.0
        %1572 = vmatprep.subr.mxu0 0.0
        %1573 = vmatpush1.msra.mxu0 0.0
        %1574 = vmatprep.subr.mxu0 0.0
        %1575 = vmatpush1.msra.mxu0 0.0
        %1576 = vmatprep.subr.mxu0 0.0
        %1577 = vmatpush1.msra.mxu0 0.0
        %1578 = vmatprep.subr.mxu0 0.0
        %1579 = vmatpush1.msra.mxu0 0.0
        %1580 = vmatprep.subr.mxu0 0.0
        %1581 = vmatpush1.msra.mxu0 0.0
        %1582 = vmatprep.subr.mxu0 0.0
        %1583 = vmatpush1.msra.mxu0 0.0
        %1584 = vmatprep.subr.mxu0 0.0
        %1585 = vmatpush1.msra.mxu0 0.0
        %1586 = vmatprep.subr.mxu0 0.0
        %1587 = vmatpush1.msra.mxu0 0.0
        %1588 = vmatprep.subr.mxu0 0.0
        %1589 = vmatpush1.msra.mxu0 0.0
        %1590 = vmatprep.subr.mxu0 0.0
        %1591 = vmatpush1.msra.mxu0 0.0
        %1592 = vmatprep.subr.mxu0 0.0
        %1593 = vmatpush1.msra.mxu0 0.0
        %1594 = vmatprep.subr.mxu0 0.0
        %1595 = vmatpush1.msra.mxu0 0.0
        %1596 = vmatprep.subr.mxu0 0.0
        %1597 = vmatpush1.msra.mxu0 0.0
        %1598 = vmatprep.subr.mxu0 0.0
        %1599 = vmatpush1.msra.mxu0 0.0
        %1600 = vmatprep.subr.mxu0 0.0
        %1601 = vmatpush1.msra.mxu0 0.0
        %1602 = vmatprep.subr.mxu0 0.0
        %1603 = vmatpush1.msra.mxu0 0.0
        %1604 = vmatprep.subr.mxu0 0.0
        %1605 = vmatpush1.msra.mxu0 0.0
        %1606 = vmatprep.subr.mxu0 0.0
        %1607 = vmatpush1.msra.mxu0 0.0
        %1608 = vmatprep.subr.mxu0 0.0
        %1609 = vmatpush1.msra.mxu0 0.0
        %1610 = vmatprep.subr.mxu0 0.0
        %1611 = vmatpush1.msra.mxu0 0.0
        %1612 = vmatprep.subr.mxu0 0.0
        %1613 = vmatpush1.msra.mxu0 0.0
        %1614 = vmatprep.subr.mxu0 0.0
        %1615 = vmatpush1.msra.mxu0 0.0
        %1616 = vmatprep.subr.mxu0 0.0
        %1617 = vmatpush1.msra.mxu0 0.0
        %1618 = vmatprep.subr.mxu0 0.0
        %1619 = vmatpush1.msra.mxu0 0.0
        %1620 = vmatprep.subr.mxu0 0.0
        %1621 = vmatpush1.msra.mxu0 0.0
        %1622 = vmatprep.subr.mxu0 0.0
        %1623 = vmatpush1.msra.mxu0 0.0
        %1624 = vmatprep.subr.mxu0 0.0
        %1625 = vmatpush1.msra.mxu0 0.0
        %1626 = vmatprep.mubr.f32.mxu0 0.0
        %1627 = vmatmul.mubr.f32.gmra.mrb[0].mxu0 %v1464
        %v1628 = vpop.f32.mrb[0].mxu0
        %v1629 = vadd.f32 0.0, %v1628
        %v1630 = vpop.f32.mrb[0].mxu0
        %1631 = vmatprep.mubr.f32.mxu0 0.0
        %1632 = vmatmul.mubr.f32.gmra.mrb[0].mxu0 %v1467
        %v1633 = vpop.f32.mrb[0].mxu0
        %v1634 = vadd.f32 0.0, %v1633
        %v1635 = vpop.f32.mrb[0].mxu0
        %1636 = vmatprep.mubr.f32.mxu0 0.0
        %1637 = vmatmul.mubr.f32.gmra.mrb[0].mxu0 %v1470
        %v1638 = vpop.f32.mrb[0].mxu0
        %v1639 = vadd.f32 0.0, %v1638
        %v1640 = vpop.f32.mrb[0].mxu0
        %1641 = vmatprep.mubr.f32.mxu0 0.0
        %1642 = vmatmul.mubr.f32.gmra.mrb[0].mxu0 %v1473
        %v1643 = vpop.f32.mrb[0].mxu0
        %v1644 = vadd.f32 0.0, %v1643
        %v1645 = vpop.f32.mrb[0].mxu0
        %1646 = vmatprep.mubr.f32.mxu0 0.0
        %1647 = vmatmul.mubr.f32.gmra.mrb[0].mxu0 %v1476
        %v1648 = vpop.f32.mrb[0].mxu0
        %v1649 = vadd.f32 0.0, %v1648
        %v1650 = vpop.f32.mrb[0].mxu0
        %1651 = vmatprep.mubr.f32.mxu0 0.0
        %1652 = vmatmul.mubr.f32.gmra.mrb[0].mxu0 %v1479
        %v1653 = vpop.f32.mrb[0].mxu0
        %v1654 = vadd.f32 0.0, %v1653
        %v1655 = vpop.f32.mrb[0].mxu0
        %1656 = vmatprep.mubr.f32.mxu0 0.0
        %1657 = vmatmul.mubr.f32.gmra.mrb[0].mxu0 %v1482
        %v1658 = vpop.f32.mrb[0].mxu0
        %v1659 = vadd.f32 0.0, %v1658
        %v1660 = vpop.f32.mrb[0].mxu0
        %1661 = vmatprep.mubr.f32.mxu0 0.0
        %1662 = vmatmul.mubr.f32.gmra.mrb[0].mxu0 %v1485
        %v1663 = vpop.f32.mrb[0].mxu0
        %v1664 = vadd.f32 0.0, %v1663
        %v1665 = vpop.f32.mrb[0].mxu0
        %1666 = vmatprep.mubr.f32.mxu0 0.0
        %1667 = vmatmul.mubr.f32.gmra.mrb[0].mxu0 %v1488
        %v1668 = vpop.f32.mrb[0].mxu0
        %v1669 = vadd.f32 0.0, %v1668
        %v1670 = vpop.f32.mrb[0].mxu0
        %1671 = vmatprep.mubr.f32.mxu0 0.0
        %1672 = vmatmul.mubr.f32.gmra.mrb[0].mxu0 %v1491
        %v1673 = vpop.f32.mrb[0].mxu0
        %v1674 = vadd.f32 0.0, %v1673
        %v1675 = vpop.f32.mrb[0].mxu0
        %1676 = vmatprep.mubr.f32.mxu0 0.0
        %1677 = vmatmul.mubr.f32.gmra.mrb[0].mxu0 %v1494
        %v1678 = vpop.f32.mrb[0].mxu0
        %v1679 = vadd.f32 0.0, %v1678
        %v1680 = vpop.f32.mrb[0].mxu0
        %1681 = vmatprep.mubr.f32.mxu0 0.0
        %1682 = vmatmul.mubr.f32.gmra.mrb[0].mxu0 %v1497
        %v1683 = vpop.f32.mrb[0].mxu0
        %v1684 = vadd.f32 0.0, %v1683
        %v1685 = vpop.f32.mrb[0].mxu0
        %1686 = vmatprep.mubr.f32.mxu0 0.0
        %1687 = vmatmul.mubr.f32.gmra.mrb[0].mxu0 %v1500
        %v1688 = vpop.f32.mrb[0].mxu0
        %v1689 = vadd.f32 0.0, %v1688
        %v1690 = vpop.f32.mrb[0].mxu0
        %1691 = vmatprep.mubr.f32.mxu0 0.0
        %1692 = vmatmul.mubr.f32.gmra.mrb[0].mxu0 %v1503
        %v1693 = vpop.f32.mrb[0].mxu0
        %v1694 = vadd.f32 0.0, %v1693
        %v1695 = vpop.f32.mrb[0].mxu0
        %1696 = vmatprep.mubr.f32.mxu0 0.0
        %1697 = vmatmul.mubr.f32.gmra.mrb[0].mxu0 %v1506
        %v1698 = vpop.f32.mrb[0].mxu0
        %v1699 = vadd.f32 0.0, %v1698
        %v1700 = vpop.f32.mrb[0].mxu0
        %1701 = vmatprep.mubr.f32.mxu0 0.0
        %1702 = vmatmul.mubr.f32.gmra.mrb[0].mxu0 %v1509
        %v1703 = vpop.f32.mrb[0].mxu0
        %v1704 = vadd.f32 0.0, %v1703
        %v1705 = vpop.f32.mrb[0].mxu0
        %1706 = vmatprep.mubr.f32.mxu0 0.0
        %1707 = vmatmul.mubr.f32.gmra.mrb[0].mxu0 %v1512
        %v1708 = vpop.f32.mrb[0].mxu0
        %v1709 = vadd.f32 0.0, %v1708
        %v1710 = vpop.f32.mrb[0].mxu0
        %1711 = vmatprep.mubr.f32.mxu0 0.0
        %1712 = vmatmul.mubr.f32.gmra.mrb[0].mxu0 %v1515
        %v1713 = vpop.f32.mrb[0].mxu0
        %v1714 = vadd.f32 0.0, %v1713
        %v1715 = vpop.f32.mrb[0].mxu0
        %1716 = vmatprep.mubr.f32.mxu0 0.0
        %1717 = vmatmul.mubr.f32.gmra.mrb[0].mxu0 %v1518
        %v1718 = vpop.f32.mrb[0].mxu0
        %v1719 = vadd.f32 0.0, %v1718
        %v1720 = vpop.f32.mrb[0].mxu0
        %1721 = vmatprep.mubr.f32.mxu0 0.0
        %1722 = vmatmul.mubr.f32.gmra.mrb[0].mxu0 %v1521
        %v1723 = vpop.f32.mrb[0].mxu0
        %v1724 = vadd.f32 0.0, %v1723
        %v1725 = vpop.f32.mrb[0].mxu0
        %1726 = vmatprep.mubr.f32.mxu0 0.0
        %1727 = vmatmul.mubr.f32.gmra.mrb[0].mxu0 %v1524
        %v1728 = vpop.f32.mrb[0].mxu0
        %v1729 = vadd.f32 0.0, %v1728
        %v1730 = vpop.f32.mrb[0].mxu0
        %1731 = vmatprep.mubr.f32.mxu0 0.0
        %1732 = vmatmul.mubr.f32.gmra.mrb[0].mxu0 %v1527
        %v1733 = vpop.f32.mrb[0].mxu0
        %v1734 = vadd.f32 0.0, %v1733
        %v1735 = vpop.f32.mrb[0].mxu0
        %1736 = vmatprep.mubr.f32.mxu0 0.0
        %1737 = vmatmul.mubr.f32.gmra.mrb[0].mxu0 %v1530
        %v1738 = vpop.f32.mrb[0].mxu0
        %v1739 = vadd.f32 0.0, %v1738
        %v1740 = vpop.f32.mrb[0].mxu0
        %1741 = vmatprep.mubr.f32.mxu0 0.0
        %1742 = vmatmul.mubr.f32.gmra.mrb[0].mxu0 %v1533
        %v1743 = vpop.f32.mrb[0].mxu0
        %v1744 = vadd.f32 0.0, %v1743
        %v1745 = vpop.f32.mrb[0].mxu0
        %1746 = vmatprep.mubr.f32.mxu0 0.0
        %1747 = vmatmul.mubr.f32.gmra.mrb[0].mxu0 %v1536
        %v1748 = vpop.f32.mrb[0].mxu0
        %v1749 = vadd.f32 0.0, %v1748
        %v1750 = vpop.f32.mrb[0].mxu0
        %1751 = vmatprep.mubr.f32.mxu0 0.0
        %1752 = vmatmul.mubr.f32.gmra.mrb[0].mxu0 %v1539
        %v1753 = vpop.f32.mrb[0].mxu0
        %v1754 = vadd.f32 0.0, %v1753
        %v1755 = vpop.f32.mrb[0].mxu0
        %1756 = vmatprep.mubr.f32.mxu0 0.0
        %1757 = vmatmul.mubr.f32.gmra.mrb[0].mxu0 %v1542
        %v1758 = vpop.f32.mrb[0].mxu0
        %v1759 = vadd.f32 0.0, %v1758
        %v1760 = vpop.f32.mrb[0].mxu0
        %1761 = vmatprep.mubr.f32.mxu0 0.0
        %1762 = vmatmul.mubr.f32.gmra.mrb[0].mxu0 %v1545
        %v1763 = vpop.f32.mrb[0].mxu0
        %v1764 = vadd.f32 0.0, %v1763
        %v1765 = vpop.f32.mrb[0].mxu0
        %1766 = vmatprep.mubr.f32.mxu0 0.0
        %1767 = vmatmul.mubr.f32.gmra.mrb[0].mxu0 %v1548
        %v1768 = vpop.f32.mrb[0].mxu0
        %v1769 = vadd.f32 0.0, %v1768
        %v1770 = vpop.f32.mrb[0].mxu0
        %1771 = vmatprep.mubr.f32.mxu0 0.0
        %1772 = vmatmul.mubr.f32.gmra.mrb[0].mxu0 %v1551
        %v1773 = vpop.f32.mrb[0].mxu0
        %v1774 = vadd.f32 0.0, %v1773
        %v1775 = vpop.f32.mrb[0].mxu0
        %1776 = vmatprep.mubr.f32.mxu0 0.0
        %1777 = vmatmul.mubr.f32.gmra.mrb[0].mxu0 %v1554
        %v1778 = vpop.f32.mrb[0].mxu0
        %v1779 = vadd.f32 0.0, %v1778
        %v1780 = vpop.f32.mrb[0].mxu0
        %1781 = vmatprep.mubr.f32.mxu0 0.0
        %1782 = vmatmul.mubr.f32.gmra.mrb[0].mxu0 %v1557
        %v1783 = vpop.f32.mrb[0].mxu0
        %v1784 = vadd.f32 0.0, %v1783
        %v1785 = vpop.f32.mrb[0].mxu0
        %1786 = vdwg.mxu0
        %v1787 = vld [vmem:[#allocation2] sm:$0xff]
        %v1788 = vld [vmem:[#allocation2 + $0x8] sm:$0xff]
        %v1789 = vld [vmem:[#allocation2 + $0x10] sm:$0xff]
        %v1790 = vld [vmem:[#allocation2 + $0x18] sm:$0xff]
        %v1791 = vld [vmem:[#allocation2 + $0x20] sm:$0xff]
        %v1792 = vld [vmem:[#allocation2 + $0x28] sm:$0xff]
        %v1793 = vld [vmem:[#allocation2 + $0x30] sm:$0xff]
        %v1794 = vld [vmem:[#allocation2 + $0x38] sm:$0xff]
        %v1795 = vld [vmem:[#allocation2 + $0x40] sm:$0xff]
        %v1796 = vld [vmem:[#allocation2 + $0x48] sm:$0xff]
        %v1797 = vld [vmem:[#allocation2 + $0x50] sm:$0xff]
        %v1798 = vld [vmem:[#allocation2 + $0x58] sm:$0xff]
        %v1799 = vld [vmem:[#allocation2 + $0x60] sm:$0xff]
        %v1800 = vld [vmem:[#allocation2 + $0x68] sm:$0xff]
        %v1801 = vld [vmem:[#allocation2 + $0x70] sm:$0xff]
        %v1802 = vld [vmem:[#allocation2 + $0x78] sm:$0xff]
        %v1803 = vld [vmem:[#allocation2 + $0x80] sm:$0xff]
        %v1804 = vld [vmem:[#allocation2 + $0x88] sm:$0xff]
        %v1805 = vld [vmem:[#allocation2 + $0x90] sm:$0xff]
        %v1806 = vld [vmem:[#allocation2 + $0x98] sm:$0xff]
        %v1807 = vld [vmem:[#allocation2 + $0xa0] sm:$0xff]
        %v1808 = vld [vmem:[#allocation2 + $0xa8] sm:$0xff]
        %v1809 = vld [vmem:[#allocation2 + $0xb0] sm:$0xff]
        %v1810 = vld [vmem:[#allocation2 + $0xb8] sm:$0xff]
        %v1811 = vld [vmem:[#allocation2 + $0xc0] sm:$0xff]
        %v1812 = vld [vmem:[#allocation2 + $0xc8] sm:$0xff]
        %v1813 = vld [vmem:[#allocation2 + $0xd0] sm:$0xff]
        %v1814 = vld [vmem:[#allocation2 + $0xd8] sm:$0xff]
        %v1815 = vld [vmem:[#allocation2 + $0xe0] sm:$0xff]
        %v1816 = vld [vmem:[#allocation2 + $0xe8] sm:$0xff]
        %v1817 = vld [vmem:[#allocation2 + $0xf0] sm:$0xff]
        %v1818 = vld [vmem:[#allocation2 + $0xf8] sm:$0xff]
        %v1819 = vadd.f32 %v1787, %v1629
        %v1820 = vadd.f32 %v1788, %v1634
        %v1821 = vadd.f32 %v1789, %v1639
        %v1822 = vadd.f32 %v1790, %v1644
        %v1823 = vadd.f32 %v1791, %v1649
        %v1824 = vadd.f32 %v1792, %v1654
        %v1825 = vadd.f32 %v1793, %v1659
        %v1826 = vadd.f32 %v1794, %v1664
        %v1827 = vadd.f32 %v1795, %v1669
        %v1828 = vadd.f32 %v1796, %v1674
        %v1829 = vadd.f32 %v1797, %v1679
        %v1830 = vadd.f32 %v1798, %v1684
        %v1831 = vadd.f32 %v1799, %v1689
        %v1832 = vadd.f32 %v1800, %v1694
        %v1833 = vadd.f32 %v1801, %v1699
        %v1834 = vadd.f32 %v1802, %v1704
        %v1835 = vadd.f32 %v1803, %v1709
        %v1836 = vadd.f32 %v1804, %v1714
        %v1837 = vadd.f32 %v1805, %v1719
        %v1838 = vadd.f32 %v1806, %v1724
        %v1839 = vadd.f32 %v1807, %v1729
        %v1840 = vadd.f32 %v1808, %v1734
        %v1841 = vadd.f32 %v1809, %v1739
        %v1842 = vadd.f32 %v1810, %v1744
        %v1843 = vadd.f32 %v1811, %v1749
        %v1844 = vadd.f32 %v1812, %v1754
        %v1845 = vadd.f32 %v1813, %v1759
        %v1846 = vadd.f32 %v1814, %v1764
        %v1847 = vadd.f32 %v1815, %v1769
        %v1848 = vadd.f32 %v1816, %v1774
        %v1849 = vadd.f32 %v1817, %v1779
        %v1850 = vadd.f32 %v1818, %v1784
        %1851 = vst [vmem:[#allocation2] sm:$0xff] %v1819
        %1852 = vst [vmem:[#allocation2 + $0x8] sm:$0xff] %v1820
        %1853 = vst [vmem:[#allocation2 + $0x10] sm:$0xff] %v1821
        %1854 = vst [vmem:[#allocation2 + $0x18] sm:$0xff] %v1822
        %1855 = vst [vmem:[#allocation2 + $0x20] sm:$0xff] %v1823
        %1856 = vst [vmem:[#allocation2 + $0x28] sm:$0xff] %v1824
        %1857 = vst [vmem:[#allocation2 + $0x30] sm:$0xff] %v1825
        %1858 = vst [vmem:[#allocation2 + $0x38] sm:$0xff] %v1826
        %1859 = vst [vmem:[#allocation2 + $0x40] sm:$0xff] %v1827
        %1860 = vst [vmem:[#allocation2 + $0x48] sm:$0xff] %v1828
        %1861 = vst [vmem:[#allocation2 + $0x50] sm:$0xff] %v1829
        %1862 = vst [vmem:[#allocation2 + $0x58] sm:$0xff] %v1830
        %1863 = vst [vmem:[#allocation2 + $0x60] sm:$0xff] %v1831
        %1864 = vst [vmem:[#allocation2 + $0x68] sm:$0xff] %v1832
        %1865 = vst [vmem:[#allocation2 + $0x70] sm:$0xff] %v1833
        %1866 = vst [vmem:[#allocation2 + $0x78] sm:$0xff] %v1834
        %1867 = vst [vmem:[#allocation2 + $0x80] sm:$0xff] %v1835
        %1868 = vst [vmem:[#allocation2 + $0x88] sm:$0xff] %v1836
        %1869 = vst [vmem:[#allocation2 + $0x90] sm:$0xff] %v1837
        %1870 = vst [vmem:[#allocation2 + $0x98] sm:$0xff] %v1838
        %1871 = vst [vmem:[#allocation2 + $0xa0] sm:$0xff] %v1839
        %1872 = vst [vmem:[#allocation2 + $0xa8] sm:$0xff] %v1840
        %1873 = vst [vmem:[#allocation2 + $0xb0] sm:$0xff] %v1841
        %1874 = vst [vmem:[#allocation2 + $0xb8] sm:$0xff] %v1842
        %1875 = vst [vmem:[#allocation2 + $0xc0] sm:$0xff] %v1843
        %1876 = vst [vmem:[#allocation2 + $0xc8] sm:$0xff] %v1844
        %1877 = vst [vmem:[#allocation2 + $0xd0] sm:$0xff] %v1845
        %1878 = vst [vmem:[#allocation2 + $0xd8] sm:$0xff] %v1846
        %1879 = vst [vmem:[#allocation2 + $0xe0] sm:$0xff] %v1847
        %1880 = vst [vmem:[#allocation2 + $0xe8] sm:$0xff] %v1848
        %1881 = vst [vmem:[#allocation2 + $0xf0] sm:$0xff] %v1849
        %1882 = vst [vmem:[#allocation2 + $0xf8] sm:$0xff] %v1850
        %s1883 = sadd.s32 %s254, 2
        %s1884 = smul.u32 %s1883, 24
        %s1885 = scalar_lea.vmem %s222, %s1884 [#allocation3]
        %v1886 = vld [vmem:[%s1885] sm:$0xff]
        %v1887 = vld [vmem:[%s1885 + $0x8] sm:$0xff]
        %v1888 = vld [vmem:[%s1885 + $0x18] sm:$0xff]
        %v1889 = vld [vmem:[%s1885 + $0x20] sm:$0xff]
        %v1890 = vld [vmem:[%s1885 + $0x30] sm:$0xff]
        %v1891 = vld [vmem:[%s1885 + $0x38] sm:$0xff]
        %v1892 = vld [vmem:[%s1885 + $0x48] sm:$0xff]
        %v1893 = vld [vmem:[%s1885 + $0x50] sm:$0xff]
        %v1894 = vld [vmem:[%s1885 + $0x60] sm:$0xff]
        %v1895 = vld [vmem:[%s1885 + $0x68] sm:$0xff]
        %v1896 = vld [vmem:[%s1885 + $0x78] sm:$0xff]
        %v1897 = vld [vmem:[%s1885 + $0x80] sm:$0xff]
        %v1898 = vld [vmem:[%s1885 + $0x90] sm:$0xff]
        %v1899 = vld [vmem:[%s1885 + $0x98] sm:$0xff]
        %v1900 = vld [vmem:[%s1885 + $0xa8] sm:$0xff]
        %v1901 = vld [vmem:[%s1885 + $0xb0] sm:$0xff]
        %v1902 = vld [vmem:[%s1885 + $0xc0] sm:$0xff]
        %v1903 = vld [vmem:[%s1885 + $0xc8] sm:$0xff]
        %v1904 = vld [vmem:[%s1885 + $0xd8] sm:$0xff]
        %v1905 = vld [vmem:[%s1885 + $0xe0] sm:$0xff]
        %v1906 = vld [vmem:[%s1885 + $0xf0] sm:$0xff]
        %v1907 = vld [vmem:[%s1885 + $0xf8] sm:$0xff]
        %v1908 = vld [vmem:[%s1885 + $0x108] sm:$0xff]
        %v1909 = vld [vmem:[%s1885 + $0x110] sm:$0xff]
        %v1910 = vld [vmem:[%s1885 + $0x120] sm:$0xff]
        %v1911 = vld [vmem:[%s1885 + $0x128] sm:$0xff]
        %v1912 = vld [vmem:[%s1885 + $0x138] sm:$0xff]
        %v1913 = vld [vmem:[%s1885 + $0x140] sm:$0xff]
        %v1914 = vld [vmem:[%s1885 + $0x150] sm:$0xff]
        %v1915 = vld [vmem:[%s1885 + $0x158] sm:$0xff]
        %v1916 = vld [vmem:[%s1885 + $0x168] sm:$0xff]
        %v1917 = vld [vmem:[%s1885 + $0x170] sm:$0xff]
        %v1918 = vld [vmem:[%s1885 + $0x1] sm:$0xff]
        %v1919 = vld [vmem:[%s1885 + $0x9] sm:$0xff]
        %v1920 = vld [vmem:[%s1885 + $0x19] sm:$0xff]
        %v1921 = vld [vmem:[%s1885 + $0x21] sm:$0xff]
        %v1922 = vld [vmem:[%s1885 + $0x31] sm:$0xff]
        %v1923 = vld [vmem:[%s1885 + $0x39] sm:$0xff]
        %v1924 = vld [vmem:[%s1885 + $0x49] sm:$0xff]
        %v1925 = vld [vmem:[%s1885 + $0x51] sm:$0xff]
        %v1926 = vld [vmem:[%s1885 + $0x61] sm:$0xff]
        %v1927 = vld [vmem:[%s1885 + $0x69] sm:$0xff]
        %v1928 = vld [vmem:[%s1885 + $0x79] sm:$0xff]
        %v1929 = vld [vmem:[%s1885 + $0x81] sm:$0xff]
        %v1930 = vld [vmem:[%s1885 + $0x91] sm:$0xff]
        %v1931 = vld [vmem:[%s1885 + $0x99] sm:$0xff]
        %v1932 = vld [vmem:[%s1885 + $0xa9] sm:$0xff]
        %v1933 = vld [vmem:[%s1885 + $0xb1] sm:$0xff]
        %v1934 = vld [vmem:[%s1885 + $0xc1] sm:$0xff]
        %v1935 = vld [vmem:[%s1885 + $0xc9] sm:$0xff]
        %v1936 = vld [vmem:[%s1885 + $0xd9] sm:$0xff]
        %v1937 = vld [vmem:[%s1885 + $0xe1] sm:$0xff]
        %v1938 = vld [vmem:[%s1885 + $0xf1] sm:$0xff]
        %v1939 = vld [vmem:[%s1885 + $0xf9] sm:$0xff]
        %v1940 = vld [vmem:[%s1885 + $0x109] sm:$0xff]
        %v1941 = vld [vmem:[%s1885 + $0x111] sm:$0xff]
        %v1942 = vld [vmem:[%s1885 + $0x121] sm:$0xff]
        %v1943 = vld [vmem:[%s1885 + $0x129] sm:$0xff]
        %v1944 = vld [vmem:[%s1885 + $0x139] sm:$0xff]
        %v1945 = vld [vmem:[%s1885 + $0x141] sm:$0xff]
        %v1946 = vld [vmem:[%s1885 + $0x151] sm:$0xff]
        %v1947 = vld [vmem:[%s1885 + $0x159] sm:$0xff]
        %v1948 = vld [vmem:[%s1885 + $0x169] sm:$0xff]
        %v1949 = vld [vmem:[%s1885 + $0x171] sm:$0xff]
        %v1950 = vld [vmem:[%s1885 + $0x2] sm:$0xff]
        %v1951 = vld [vmem:[%s1885 + $0xa] sm:$0xff]
        %v1952 = vld [vmem:[%s1885 + $0x1a] sm:$0xff]
        %v1953 = vld [vmem:[%s1885 + $0x22] sm:$0xff]
        %v1954 = vld [vmem:[%s1885 + $0x32] sm:$0xff]
        %v1955 = vld [vmem:[%s1885 + $0x3a] sm:$0xff]
        %v1956 = vld [vmem:[%s1885 + $0x4a] sm:$0xff]
        %v1957 = vld [vmem:[%s1885 + $0x52] sm:$0xff]
        %v1958 = vld [vmem:[%s1885 + $0x62] sm:$0xff]
        %v1959 = vld [vmem:[%s1885 + $0x6a] sm:$0xff]
        %v1960 = vld [vmem:[%s1885 + $0x7a] sm:$0xff]
        %v1961 = vld [vmem:[%s1885 + $0x82] sm:$0xff]
        %v1962 = vld [vmem:[%s1885 + $0x92] sm:$0xff]
        %v1963 = vld [vmem:[%s1885 + $0x9a] sm:$0xff]
        %v1964 = vld [vmem:[%s1885 + $0xaa] sm:$0xff]
        %v1965 = vld [vmem:[%s1885 + $0xb2] sm:$0xff]
        %v1966 = vld [vmem:[%s1885 + $0xc2] sm:$0xff]
        %v1967 = vld [vmem:[%s1885 + $0xca] sm:$0xff]
        %v1968 = vld [vmem:[%s1885 + $0xda] sm:$0xff]
        %v1969 = vld [vmem:[%s1885 + $0xe2] sm:$0xff]
        %v1970 = vld [vmem:[%s1885 + $0xf2] sm:$0xff]
        %v1971 = vld [vmem:[%s1885 + $0xfa] sm:$0xff]
        %v1972 = vld [vmem:[%s1885 + $0x10a] sm:$0xff]
        %v1973 = vld [vmem:[%s1885 + $0x112] sm:$0xff]
        %v1974 = vld [vmem:[%s1885 + $0x122] sm:$0xff]
        %v1975 = vld [vmem:[%s1885 + $0x12a] sm:$0xff]
        %v1976 = vld [vmem:[%s1885 + $0x13a] sm:$0xff]
        %v1977 = vld [vmem:[%s1885 + $0x142] sm:$0xff]
        %v1978 = vld [vmem:[%s1885 + $0x152] sm:$0xff]
        %v1979 = vld [vmem:[%s1885 + $0x15a] sm:$0xff]
        %v1980 = vld [vmem:[%s1885 + $0x16a] sm:$0xff]
        %v1981 = vld [vmem:[%s1885 + $0x172] sm:$0xff]
        %2014 = vrot.lane.b32.xlu0 %v1918, 4
        %v2015 = vpop.permute.xlu0 %2014
        %2016 = vrot.lane.b32.xlu0 %v1919, 4
        %v2017 = vpop.permute.xlu0 %2016
        %2018 = vrot.lane.b32.xlu0 %v1920, 4
        %v2019 = vpop.permute.xlu0 %2018
        %2020 = vrot.lane.b32.xlu0 %v1921, 4
        %v2021 = vpop.permute.xlu0 %2020
        %2022 = vrot.lane.b32.xlu0 %v1922, 4
        %v2023 = vpop.permute.xlu0 %2022
        %2024 = vrot.lane.b32.xlu0 %v1923, 4
        %v2025 = vpop.permute.xlu0 %2024
        %2026 = vrot.lane.b32.xlu0 %v1924, 4
        %v2027 = vpop.permute.xlu0 %2026
        %2028 = vrot.lane.b32.xlu0 %v1925, 4
        %v2029 = vpop.permute.xlu0 %2028
        %2030 = vrot.lane.b32.xlu0 %v1926, 4
        %v2031 = vpop.permute.xlu0 %2030
        %2032 = vrot.lane.b32.xlu0 %v1927, 4
        %v2033 = vpop.permute.xlu0 %2032
        %2034 = vrot.lane.b32.xlu0 %v1928, 4
        %v2035 = vpop.permute.xlu0 %2034
        %2036 = vrot.lane.b32.xlu0 %v1929, 4
        %v2037 = vpop.permute.xlu0 %2036
        %2038 = vrot.lane.b32.xlu0 %v1930, 4
        %v2039 = vpop.permute.xlu0 %2038
        %2040 = vrot.lane.b32.xlu0 %v1931, 4
        %v2041 = vpop.permute.xlu0 %2040
        %2042 = vrot.lane.b32.xlu0 %v1932, 4
        %v2043 = vpop.permute.xlu0 %2042
        %2044 = vrot.lane.b32.xlu0 %v1933, 4
        %v2045 = vpop.permute.xlu0 %2044
        %2046 = vrot.lane.b32.xlu0 %v1934, 4
        %v2047 = vpop.permute.xlu0 %2046
        %2048 = vrot.lane.b32.xlu0 %v1935, 4
        %v2049 = vpop.permute.xlu0 %2048
        %2050 = vrot.lane.b32.xlu0 %v1936, 4
        %v2051 = vpop.permute.xlu0 %2050
        %2052 = vrot.lane.b32.xlu0 %v1937, 4
        %v2053 = vpop.permute.xlu0 %2052
        %2054 = vrot.lane.b32.xlu0 %v1938, 4
        %v2055 = vpop.permute.xlu0 %2054
        %2056 = vrot.lane.b32.xlu0 %v1939, 4
        %v2057 = vpop.permute.xlu0 %2056
        %2058 = vrot.lane.b32.xlu0 %v1940, 4
        %v2059 = vpop.permute.xlu0 %2058
        %2060 = vrot.lane.b32.xlu0 %v1941, 4
        %v2061 = vpop.permute.xlu0 %2060
        %2062 = vrot.lane.b32.xlu0 %v1942, 4
        %v2063 = vpop.permute.xlu0 %2062
        %2064 = vrot.lane.b32.xlu0 %v1943, 4
        %v2065 = vpop.permute.xlu0 %2064
        %2066 = vrot.lane.b32.xlu0 %v1944, 4
        %v2067 = vpop.permute.xlu0 %2066
        %2068 = vrot.lane.b32.xlu0 %v1945, 4
        %v2069 = vpop.permute.xlu0 %2068
        %2070 = vrot.lane.b32.xlu0 %v1946, 4
        %v2071 = vpop.permute.xlu0 %2070
        %2072 = vrot.lane.b32.xlu0 %v1947, 4
        %v2073 = vpop.permute.xlu0 %2072
        %2074 = vrot.lane.b32.xlu0 %v1948, 4
        %v2075 = vpop.permute.xlu0 %2074
        %2076 = vrot.lane.b32.xlu0 %v1949, 4
        %v2077 = vpop.permute.xlu0 %2076
        %2142 = vrot.lane.b32.xlu0 %v1950, 8
        %v2143 = vpop.permute.xlu0 %2142
        %2144 = vrot.lane.b32.xlu0 %v1951, 8
        %v2145 = vpop.permute.xlu0 %2144
        %2146 = vrot.lane.b32.xlu0 %v1952, 8
        %v2147 = vpop.permute.xlu0 %2146
        %2148 = vrot.lane.b32.xlu0 %v1953, 8
        %v2149 = vpop.permute.xlu0 %2148
        %2150 = vrot.lane.b32.xlu0 %v1954, 8
        %v2151 = vpop.permute.xlu0 %2150
        %2152 = vrot.lane.b32.xlu0 %v1955, 8
        %v2153 = vpop.permute.xlu0 %2152
        %2154 = vrot.lane.b32.xlu0 %v1956, 8
        %v2155 = vpop.permute.xlu0 %2154
        %2156 = vrot.lane.b32.xlu0 %v1957, 8
        %v2157 = vpop.permute.xlu0 %2156
        %2158 = vrot.lane.b32.xlu0 %v1958, 8
        %v2159 = vpop.permute.xlu0 %2158
        %2160 = vrot.lane.b32.xlu0 %v1959, 8
        %v2161 = vpop.permute.xlu0 %2160
        %2162 = vrot.lane.b32.xlu0 %v1960, 8
        %v2163 = vpop.permute.xlu0 %2162
        %2164 = vrot.lane.b32.xlu0 %v1961, 8
        %v2165 = vpop.permute.xlu0 %2164
        %2166 = vrot.lane.b32.xlu0 %v1962, 8
        %v2167 = vpop.permute.xlu0 %2166
        %2168 = vrot.lane.b32.xlu0 %v1963, 8
        %v2169 = vpop.permute.xlu0 %2168
        %2170 = vrot.lane.b32.xlu0 %v1964, 8
        %v2171 = vpop.permute.xlu0 %2170
        %2172 = vrot.lane.b32.xlu0 %v1965, 8
        %v2173 = vpop.permute.xlu0 %2172
        %2174 = vrot.lane.b32.xlu0 %v1966, 8
        %v2175 = vpop.permute.xlu0 %2174
        %2176 = vrot.lane.b32.xlu0 %v1967, 8
        %v2177 = vpop.permute.xlu0 %2176
        %2178 = vrot.lane.b32.xlu0 %v1968, 8
        %v2179 = vpop.permute.xlu0 %2178
        %2180 = vrot.lane.b32.xlu0 %v1969, 8
        %v2181 = vpop.permute.xlu0 %2180
        %2182 = vrot.lane.b32.xlu0 %v1970, 8
        %v2183 = vpop.permute.xlu0 %2182
        %2184 = vrot.lane.b32.xlu0 %v1971, 8
        %v2185 = vpop.permute.xlu0 %2184
        %2186 = vrot.lane.b32.xlu0 %v1972, 8
        %v2187 = vpop.permute.xlu0 %2186
        %2188 = vrot.lane.b32.xlu0 %v1973, 8
        %v2189 = vpop.permute.xlu0 %2188
        %2190 = vrot.lane.b32.xlu0 %v1974, 8
        %v2191 = vpop.permute.xlu0 %2190
        %2192 = vrot.lane.b32.xlu0 %v1975, 8
        %v2193 = vpop.permute.xlu0 %2192
        %2194 = vrot.lane.b32.xlu0 %v1976, 8
        %v2195 = vpop.permute.xlu0 %2194
        %2196 = vrot.lane.b32.xlu0 %v1977, 8
        %v2197 = vpop.permute.xlu0 %2196
        %2198 = vrot.lane.b32.xlu0 %v1978, 8
        %v2199 = vpop.permute.xlu0 %2198
        %2200 = vrot.lane.b32.xlu0 %v1979, 8
        %v2201 = vpop.permute.xlu0 %2200
        %2202 = vrot.lane.b32.xlu0 %v1980, 8
        %v2203 = vpop.permute.xlu0 %2202
        %2204 = vrot.lane.b32.xlu0 %v1981, 8
        %v2205 = vpop.permute.xlu0 %2204
        %v2238 = vsel %vm609, %v1886, %v2015
        %v2239 = vsel %vm609, %v1887, %v2017
        %v2240 = vsel %vm609, %v1888, %v2019
        %v2241 = vsel %vm609, %v1889, %v2021
        %v2242 = vsel %vm609, %v1890, %v2023
        %v2243 = vsel %vm609, %v1891, %v2025
        %v2244 = vsel %vm609, %v1892, %v2027
        %v2245 = vsel %vm609, %v1893, %v2029
        %v2246 = vsel %vm609, %v1894, %v2031
        %v2247 = vsel %vm609, %v1895, %v2033
        %v2248 = vsel %vm609, %v1896, %v2035
        %v2249 = vsel %vm609, %v1897, %v2037
        %v2250 = vsel %vm609, %v1898, %v2039
        %v2251 = vsel %vm609, %v1899, %v2041
        %v2252 = vsel %vm609, %v1900, %v2043
        %v2253 = vsel %vm609, %v1901, %v2045
        %v2254 = vsel %vm609, %v1902, %v2047
        %v2255 = vsel %vm609, %v1903, %v2049
        %v2256 = vsel %vm609, %v1904, %v2051
        %v2257 = vsel %vm609, %v1905, %v2053
        %v2258 = vsel %vm609, %v1906, %v2055
        %v2259 = vsel %vm609, %v1907, %v2057
        %v2260 = vsel %vm609, %v1908, %v2059
        %v2261 = vsel %vm609, %v1909, %v2061
        %v2262 = vsel %vm609, %v1910, %v2063
        %v2263 = vsel %vm609, %v1911, %v2065
        %v2264 = vsel %vm609, %v1912, %v2067
        %v2265 = vsel %vm609, %v1913, %v2069
        %v2266 = vsel %vm609, %v1914, %v2071
        %v2267 = vsel %vm609, %v1915, %v2073
        %v2268 = vsel %vm609, %v1916, %v2075
        %v2269 = vsel %vm609, %v1917, %v2077
        %v2270 = vsel %vm642, %v2238, %v2143
        %v2271 = vsel %vm642, %v2239, %v2145
        %v2272 = vsel %vm642, %v2240, %v2147
        %v2273 = vsel %vm642, %v2241, %v2149
        %v2274 = vsel %vm642, %v2242, %v2151
        %v2275 = vsel %vm642, %v2243, %v2153
        %v2276 = vsel %vm642, %v2244, %v2155
        %v2277 = vsel %vm642, %v2245, %v2157
        %v2278 = vsel %vm642, %v2246, %v2159
        %v2279 = vsel %vm642, %v2247, %v2161
        %v2280 = vsel %vm642, %v2248, %v2163
        %v2281 = vsel %vm642, %v2249, %v2165
        %v2282 = vsel %vm642, %v2250, %v2167
        %v2283 = vsel %vm642, %v2251, %v2169
        %v2284 = vsel %vm642, %v2252, %v2171
        %v2285 = vsel %vm642, %v2253, %v2173
        %v2286 = vsel %vm642, %v2254, %v2175
        %v2287 = vsel %vm642, %v2255, %v2177
        %v2288 = vsel %vm642, %v2256, %v2179
        %v2289 = vsel %vm642, %v2257, %v2181
        %v2290 = vsel %vm642, %v2258, %v2183
        %v2291 = vsel %vm642, %v2259, %v2185
        %v2292 = vsel %vm642, %v2260, %v2187
        %v2293 = vsel %vm642, %v2261, %v2189
        %v2294 = vsel %vm642, %v2262, %v2191
        %v2295 = vsel %vm642, %v2263, %v2193
        %v2296 = vsel %vm642, %v2264, %v2195
        %v2297 = vsel %vm642, %v2265, %v2197
        %v2298 = vsel %vm642, %v2266, %v2199
        %v2299 = vsel %vm642, %v2267, %v2201
        %v2300 = vsel %vm642, %v2268, %v2203
        %v2301 = vsel %vm642, %v2269, %v2205
        %v2302 = vld [vmem:[#allocation6 + $0x18] sm:$0xff]
        %v2303 = vld [vmem:[#allocation6 + $0x20] sm:$0xf]
        %v2305 = vsel %vm684, %v2270, 0
        %v2308 = vsel %vm684, %v2271, 0
        %v2311 = vsel %vm684, %v2272, 0
        %v2314 = vsel %vm684, %v2273, 0
        %v2317 = vsel %vm684, %v2274, 0
        %v2320 = vsel %vm684, %v2275, 0
        %v2323 = vsel %vm684, %v2276, 0
        %v2326 = vsel %vm684, %v2277, 0
        %v2329 = vsel %vm684, %v2278, 0
        %v2332 = vsel %vm684, %v2279, 0
        %v2335 = vsel %vm684, %v2280, 0
        %v2338 = vsel %vm684, %v2281, 0
        %v2341 = vsel %vm684, %v2282, 0
        %v2344 = vsel %vm684, %v2283, 0
        %v2347 = vsel %vm684, %v2284, 0
        %v2350 = vsel %vm684, %v2285, 0
        %v2353 = vsel %vm684, %v2286, 0
        %v2356 = vsel %vm684, %v2287, 0
        %v2359 = vsel %vm684, %v2288, 0
        %v2362 = vsel %vm684, %v2289, 0
        %v2365 = vsel %vm684, %v2290, 0
        %v2368 = vsel %vm684, %v2291, 0
        %v2371 = vsel %vm684, %v2292, 0
        %v2374 = vsel %vm684, %v2293, 0
        %v2377 = vsel %vm684, %v2294, 0
        %v2380 = vsel %vm684, %v2295, 0
        %v2383 = vsel %vm684, %v2296, 0
        %v2386 = vsel %vm684, %v2297, 0
        %v2389 = vsel %vm684, %v2298, 0
        %v2392 = vsel %vm684, %v2299, 0
        %v2395 = vsel %vm684, %v2300, 0
        %v2398 = vsel %vm684, %v2301, 0
        %v2401 = vsel %vm781, %v2303, 0
        %2403 = vmatprep.subr.mxu0 0.0
        %2404 = vmatpush1.msra.mxu0 %v2302
        %2405 = vmatprep.subr.mxu0 0.0
        %2406 = vmatpush1.msra.mxu0 %v2401
        %2407 = vmatprep.subr.mxu0 0.0
        %2408 = vmatpush1.msra.mxu0 0.0
        %2409 = vmatprep.subr.mxu0 0.0
        %2410 = vmatpush1.msra.mxu0 0.0
        %2411 = vmatprep.subr.mxu0 0.0
        %2412 = vmatpush1.msra.mxu0 0.0
        %2413 = vmatprep.subr.mxu0 0.0
        %2414 = vmatpush1.msra.mxu0 0.0
        %2415 = vmatprep.subr.mxu0 0.0
        %2416 = vmatpush1.msra.mxu0 0.0
        %2417 = vmatprep.subr.mxu0 0.0
        %2418 = vmatpush1.msra.mxu0 0.0
        %2419 = vmatprep.subr.mxu0 0.0
        %2420 = vmatpush1.msra.mxu0 0.0
        %2421 = vmatprep.subr.mxu0 0.0
        %2422 = vmatpush1.msra.mxu0 0.0
        %2423 = vmatprep.subr.mxu0 0.0
        %2424 = vmatpush1.msra.mxu0 0.0
        %2425 = vmatprep.subr.mxu0 0.0
        %2426 = vmatpush1.msra.mxu0 0.0
        %2427 = vmatprep.subr.mxu0 0.0
        %2428 = vmatpush1.msra.mxu0 0.0
        %2429 = vmatprep.subr.mxu0 0.0
        %2430 = vmatpush1.msra.mxu0 0.0
        %2431 = vmatprep.subr.mxu0 0.0
        %2432 = vmatpush1.msra.mxu0 0.0
        %2433 = vmatprep.subr.mxu0 0.0
        %2434 = vmatpush1.msra.mxu0 0.0
        %2435 = vmatprep.subr.mxu0 0.0
        %2436 = vmatpush1.msra.mxu0 0.0
        %2437 = vmatprep.subr.mxu0 0.0
        %2438 = vmatpush1.msra.mxu0 0.0
        %2439 = vmatprep.subr.mxu0 0.0
        %2440 = vmatpush1.msra.mxu0 0.0
        %2441 = vmatprep.subr.mxu0 0.0
        %2442 = vmatpush1.msra.mxu0 0.0
        %2443 = vmatprep.subr.mxu0 0.0
        %2444 = vmatpush1.msra.mxu0 0.0
        %2445 = vmatprep.subr.mxu0 0.0
        %2446 = vmatpush1.msra.mxu0 0.0
        %2447 = vmatprep.subr.mxu0 0.0
        %2448 = vmatpush1.msra.mxu0 0.0
        %2449 = vmatprep.subr.mxu0 0.0
        %2450 = vmatpush1.msra.mxu0 0.0
        %2451 = vmatprep.subr.mxu0 0.0
        %2452 = vmatpush1.msra.mxu0 0.0
        %2453 = vmatprep.subr.mxu0 0.0
        %2454 = vmatpush1.msra.mxu0 0.0
        %2455 = vmatprep.subr.mxu0 0.0
        %2456 = vmatpush1.msra.mxu0 0.0
        %2457 = vmatprep.subr.mxu0 0.0
        %2458 = vmatpush1.msra.mxu0 0.0
        %2459 = vmatprep.subr.mxu0 0.0
        %2460 = vmatpush1.msra.mxu0 0.0
        %2461 = vmatprep.subr.mxu0 0.0
        %2462 = vmatpush1.msra.mxu0 0.0
        %2463 = vmatprep.subr.mxu0 0.0
        %2464 = vmatpush1.msra.mxu0 0.0
        %2465 = vmatprep.subr.mxu0 0.0
        %2466 = vmatpush1.msra.mxu0 0.0
        %2467 = vmatprep.mubr.f32.mxu0 0.0
        %2468 = vmatmul.mubr.f32.gmra.mrb[0].mxu0 %v2305
        %v2469 = vpop.f32.mrb[0].mxu0
        %v2470 = vadd.f32 0.0, %v2469
        %v2471 = vpop.f32.mrb[0].mxu0
        %2472 = vmatprep.mubr.f32.mxu0 0.0
        %2473 = vmatmul.mubr.f32.gmra.mrb[0].mxu0 %v2308
        %v2474 = vpop.f32.mrb[0].mxu0
        %v2475 = vadd.f32 0.0, %v2474
        %v2476 = vpop.f32.mrb[0].mxu0
        %2477 = vmatprep.mubr.f32.mxu0 0.0
        %2478 = vmatmul.mubr.f32.gmra.mrb[0].mxu0 %v2311
        %v2479 = vpop.f32.mrb[0].mxu0
        %v2480 = vadd.f32 0.0, %v2479
        %v2481 = vpop.f32.mrb[0].mxu0
        %2482 = vmatprep.mubr.f32.mxu0 0.0
        %2483 = vmatmul.mubr.f32.gmra.mrb[0].mxu0 %v2314
        %v2484 = vpop.f32.mrb[0].mxu0
        %v2485 = vadd.f32 0.0, %v2484
        %v2486 = vpop.f32.mrb[0].mxu0
        %2487 = vmatprep.mubr.f32.mxu0 0.0
        %2488 = vmatmul.mubr.f32.gmra.mrb[0].mxu0 %v2317
        %v2489 = vpop.f32.mrb[0].mxu0
        %v2490 = vadd.f32 0.0, %v2489
        %v2491 = vpop.f32.mrb[0].mxu0
        %2492 = vmatprep.mubr.f32.mxu0 0.0
        %2493 = vmatmul.mubr.f32.gmra.mrb[0].mxu0 %v2320
        %v2494 = vpop.f32.mrb[0].mxu0
        %v2495 = vadd.f32 0.0, %v2494
        %v2496 = vpop.f32.mrb[0].mxu0
        %2497 = vmatprep.mubr.f32.mxu0 0.0
        %2498 = vmatmul.mubr.f32.gmra.mrb[0].mxu0 %v2323
        %v2499 = vpop.f32.mrb[0].mxu0
        %v2500 = vadd.f32 0.0, %v2499
        %v2501 = vpop.f32.mrb[0].mxu0
        %2502 = vmatprep.mubr.f32.mxu0 0.0
        %2503 = vmatmul.mubr.f32.gmra.mrb[0].mxu0 %v2326
        %v2504 = vpop.f32.mrb[0].mxu0
        %v2505 = vadd.f32 0.0, %v2504
        %v2506 = vpop.f32.mrb[0].mxu0
        %2507 = vmatprep.mubr.f32.mxu0 0.0
        %2508 = vmatmul.mubr.f32.gmra.mrb[0].mxu0 %v2329
        %v2509 = vpop.f32.mrb[0].mxu0
        %v2510 = vadd.f32 0.0, %v2509
        %v2511 = vpop.f32.mrb[0].mxu0
        %2512 = vmatprep.mubr.f32.mxu0 0.0
        %2513 = vmatmul.mubr.f32.gmra.mrb[0].mxu0 %v2332
        %v2514 = vpop.f32.mrb[0].mxu0
        %v2515 = vadd.f32 0.0, %v2514
        %v2516 = vpop.f32.mrb[0].mxu0
        %2517 = vmatprep.mubr.f32.mxu0 0.0
        %2518 = vmatmul.mubr.f32.gmra.mrb[0].mxu0 %v2335
        %v2519 = vpop.f32.mrb[0].mxu0
        %v2520 = vadd.f32 0.0, %v2519
        %v2521 = vpop.f32.mrb[0].mxu0
        %2522 = vmatprep.mubr.f32.mxu0 0.0
        %2523 = vmatmul.mubr.f32.gmra.mrb[0].mxu0 %v2338
        %v2524 = vpop.f32.mrb[0].mxu0
        %v2525 = vadd.f32 0.0, %v2524
        %v2526 = vpop.f32.mrb[0].mxu0
        %2527 = vmatprep.mubr.f32.mxu0 0.0
        %2528 = vmatmul.mubr.f32.gmra.mrb[0].mxu0 %v2341
        %v2529 = vpop.f32.mrb[0].mxu0
        %v2530 = vadd.f32 0.0, %v2529
        %v2531 = vpop.f32.mrb[0].mxu0
        %2532 = vmatprep.mubr.f32.mxu0 0.0
        %2533 = vmatmul.mubr.f32.gmra.mrb[0].mxu0 %v2344
        %v2534 = vpop.f32.mrb[0].mxu0
        %v2535 = vadd.f32 0.0, %v2534
        %v2536 = vpop.f32.mrb[0].mxu0
        %2537 = vmatprep.mubr.f32.mxu0 0.0
        %2538 = vmatmul.mubr.f32.gmra.mrb[0].mxu0 %v2347
        %v2539 = vpop.f32.mrb[0].mxu0
        %v2540 = vadd.f32 0.0, %v2539
        %v2541 = vpop.f32.mrb[0].mxu0
        %2542 = vmatprep.mubr.f32.mxu0 0.0
        %2543 = vmatmul.mubr.f32.gmra.mrb[0].mxu0 %v2350
        %v2544 = vpop.f32.mrb[0].mxu0
        %v2545 = vadd.f32 0.0, %v2544
        %v2546 = vpop.f32.mrb[0].mxu0
        %2547 = vmatprep.mubr.f32.mxu0 0.0
        %2548 = vmatmul.mubr.f32.gmra.mrb[0].mxu0 %v2353
        %v2549 = vpop.f32.mrb[0].mxu0
        %v2550 = vadd.f32 0.0, %v2549
        %v2551 = vpop.f32.mrb[0].mxu0
        %2552 = vmatprep.mubr.f32.mxu0 0.0
        %2553 = vmatmul.mubr.f32.gmra.mrb[0].mxu0 %v2356
        %v2554 = vpop.f32.mrb[0].mxu0
        %v2555 = vadd.f32 0.0, %v2554
        %v2556 = vpop.f32.mrb[0].mxu0
        %2557 = vmatprep.mubr.f32.mxu0 0.0
        %2558 = vmatmul.mubr.f32.gmra.mrb[0].mxu0 %v2359
        %v2559 = vpop.f32.mrb[0].mxu0
        %v2560 = vadd.f32 0.0, %v2559
        %v2561 = vpop.f32.mrb[0].mxu0
        %2562 = vmatprep.mubr.f32.mxu0 0.0
        %2563 = vmatmul.mubr.f32.gmra.mrb[0].mxu0 %v2362
        %v2564 = vpop.f32.mrb[0].mxu0
        %v2565 = vadd.f32 0.0, %v2564
        %v2566 = vpop.f32.mrb[0].mxu0
        %2567 = vmatprep.mubr.f32.mxu0 0.0
        %2568 = vmatmul.mubr.f32.gmra.mrb[0].mxu0 %v2365
        %v2569 = vpop.f32.mrb[0].mxu0
        %v2570 = vadd.f32 0.0, %v2569
        %v2571 = vpop.f32.mrb[0].mxu0
        %2572 = vmatprep.mubr.f32.mxu0 0.0
        %2573 = vmatmul.mubr.f32.gmra.mrb[0].mxu0 %v2368
        %v2574 = vpop.f32.mrb[0].mxu0
        %v2575 = vadd.f32 0.0, %v2574
        %v2576 = vpop.f32.mrb[0].mxu0
        %2577 = vmatprep.mubr.f32.mxu0 0.0
        %2578 = vmatmul.mubr.f32.gmra.mrb[0].mxu0 %v2371
        %v2579 = vpop.f32.mrb[0].mxu0
        %v2580 = vadd.f32 0.0, %v2579
        %v2581 = vpop.f32.mrb[0].mxu0
        %2582 = vmatprep.mubr.f32.mxu0 0.0
        %2583 = vmatmul.mubr.f32.gmra.mrb[0].mxu0 %v2374
        %v2584 = vpop.f32.mrb[0].mxu0
        %v2585 = vadd.f32 0.0, %v2584
        %v2586 = vpop.f32.mrb[0].mxu0
        %2587 = vmatprep.mubr.f32.mxu0 0.0
        %2588 = vmatmul.mubr.f32.gmra.mrb[0].mxu0 %v2377
        %v2589 = vpop.f32.mrb[0].mxu0
        %v2590 = vadd.f32 0.0, %v2589
        %v2591 = vpop.f32.mrb[0].mxu0
        %2592 = vmatprep.mubr.f32.mxu0 0.0
        %2593 = vmatmul.mubr.f32.gmra.mrb[0].mxu0 %v2380
        %v2594 = vpop.f32.mrb[0].mxu0
        %v2595 = vadd.f32 0.0, %v2594
        %v2596 = vpop.f32.mrb[0].mxu0
        %2597 = vmatprep.mubr.f32.mxu0 0.0
        %2598 = vmatmul.mubr.f32.gmra.mrb[0].mxu0 %v2383
        %v2599 = vpop.f32.mrb[0].mxu0
        %v2600 = vadd.f32 0.0, %v2599
        %v2601 = vpop.f32.mrb[0].mxu0
        %2602 = vmatprep.mubr.f32.mxu0 0.0
        %2603 = vmatmul.mubr.f32.gmra.mrb[0].mxu0 %v2386
        %v2604 = vpop.f32.mrb[0].mxu0
        %v2605 = vadd.f32 0.0, %v2604
        %v2606 = vpop.f32.mrb[0].mxu0
        %2607 = vmatprep.mubr.f32.mxu0 0.0
        %2608 = vmatmul.mubr.f32.gmra.mrb[0].mxu0 %v2389
        %v2609 = vpop.f32.mrb[0].mxu0
        %v2610 = vadd.f32 0.0, %v2609
        %v2611 = vpop.f32.mrb[0].mxu0
        %2612 = vmatprep.mubr.f32.mxu0 0.0
        %2613 = vmatmul.mubr.f32.gmra.mrb[0].mxu0 %v2392
        %v2614 = vpop.f32.mrb[0].mxu0
        %v2615 = vadd.f32 0.0, %v2614
        %v2616 = vpop.f32.mrb[0].mxu0
        %2617 = vmatprep.mubr.f32.mxu0 0.0
        %2618 = vmatmul.mubr.f32.gmra.mrb[0].mxu0 %v2395
        %v2619 = vpop.f32.mrb[0].mxu0
        %v2620 = vadd.f32 0.0, %v2619
        %v2621 = vpop.f32.mrb[0].mxu0
        %2622 = vmatprep.mubr.f32.mxu0 0.0
        %2623 = vmatmul.mubr.f32.gmra.mrb[0].mxu0 %v2398
        %v2624 = vpop.f32.mrb[0].mxu0
        %v2625 = vadd.f32 0.0, %v2624
        %v2626 = vpop.f32.mrb[0].mxu0
        %2627 = vdwg.mxu0
        %v2628 = vld [vmem:[#allocation2] sm:$0xff]
        %v2629 = vld [vmem:[#allocation2 + $0x8] sm:$0xff]
        %v2630 = vld [vmem:[#allocation2 + $0x10] sm:$0xff]
        %v2631 = vld [vmem:[#allocation2 + $0x18] sm:$0xff]
        %v2632 = vld [vmem:[#allocation2 + $0x20] sm:$0xff]
        %v2633 = vld [vmem:[#allocation2 + $0x28] sm:$0xff]
        %v2634 = vld [vmem:[#allocation2 + $0x30] sm:$0xff]
        %v2635 = vld [vmem:[#allocation2 + $0x38] sm:$0xff]
        %v2636 = vld [vmem:[#allocation2 + $0x40] sm:$0xff]
        %v2637 = vld [vmem:[#allocation2 + $0x48] sm:$0xff]
        %v2638 = vld [vmem:[#allocation2 + $0x50] sm:$0xff]
        %v2639 = vld [vmem:[#allocation2 + $0x58] sm:$0xff]
        %v2640 = vld [vmem:[#allocation2 + $0x60] sm:$0xff]
        %v2641 = vld [vmem:[#allocation2 + $0x68] sm:$0xff]
        %v2642 = vld [vmem:[#allocation2 + $0x70] sm:$0xff]
        %v2643 = vld [vmem:[#allocation2 + $0x78] sm:$0xff]
        %v2644 = vld [vmem:[#allocation2 + $0x80] sm:$0xff]
        %v2645 = vld [vmem:[#allocation2 + $0x88] sm:$0xff]
        %v2646 = vld [vmem:[#allocation2 + $0x90] sm:$0xff]
        %v2647 = vld [vmem:[#allocation2 + $0x98] sm:$0xff]
        %v2648 = vld [vmem:[#allocation2 + $0xa0] sm:$0xff]
        %v2649 = vld [vmem:[#allocation2 + $0xa8] sm:$0xff]
        %v2650 = vld [vmem:[#allocation2 + $0xb0] sm:$0xff]
        %v2651 = vld [vmem:[#allocation2 + $0xb8] sm:$0xff]
        %v2652 = vld [vmem:[#allocation2 + $0xc0] sm:$0xff]
        %v2653 = vld [vmem:[#allocation2 + $0xc8] sm:$0xff]
        %v2654 = vld [vmem:[#allocation2 + $0xd0] sm:$0xff]
        %v2655 = vld [vmem:[#allocation2 + $0xd8] sm:$0xff]
        %v2656 = vld [vmem:[#allocation2 + $0xe0] sm:$0xff]
        %v2657 = vld [vmem:[#allocation2 + $0xe8] sm:$0xff]
        %v2658 = vld [vmem:[#allocation2 + $0xf0] sm:$0xff]
        %v2659 = vld [vmem:[#allocation2 + $0xf8] sm:$0xff]
        %v2660 = vadd.f32 %v2628, %v2470
        %v2661 = vadd.f32 %v2629, %v2475
        %v2662 = vadd.f32 %v2630, %v2480
        %v2663 = vadd.f32 %v2631, %v2485
        %v2664 = vadd.f32 %v2632, %v2490
        %v2665 = vadd.f32 %v2633, %v2495
        %v2666 = vadd.f32 %v2634, %v2500
        %v2667 = vadd.f32 %v2635, %v2505
        %v2668 = vadd.f32 %v2636, %v2510
        %v2669 = vadd.f32 %v2637, %v2515
        %v2670 = vadd.f32 %v2638, %v2520
        %v2671 = vadd.f32 %v2639, %v2525
        %v2672 = vadd.f32 %v2640, %v2530
        %v2673 = vadd.f32 %v2641, %v2535
        %v2674 = vadd.f32 %v2642, %v2540
        %v2675 = vadd.f32 %v2643, %v2545
        %v2676 = vadd.f32 %v2644, %v2550
        %v2677 = vadd.f32 %v2645, %v2555
        %v2678 = vadd.f32 %v2646, %v2560
        %v2679 = vadd.f32 %v2647, %v2565
        %v2680 = vadd.f32 %v2648, %v2570
        %v2681 = vadd.f32 %v2649, %v2575
        %v2682 = vadd.f32 %v2650, %v2580
        %v2683 = vadd.f32 %v2651, %v2585
        %v2684 = vadd.f32 %v2652, %v2590
        %v2685 = vadd.f32 %v2653, %v2595
        %v2686 = vadd.f32 %v2654, %v2600
        %v2687 = vadd.f32 %v2655, %v2605
        %v2688 = vadd.f32 %v2656, %v2610
        %v2689 = vadd.f32 %v2657, %v2615
        %v2690 = vadd.f32 %v2658, %v2620
        %v2691 = vadd.f32 %v2659, %v2625
        %2692 = vst [vmem:[#allocation2] sm:$0xff] %v2660
        %2693 = vst [vmem:[#allocation2 + $0x8] sm:$0xff] %v2661
        %2694 = vst [vmem:[#allocation2 + $0x10] sm:$0xff] %v2662
        %2695 = vst [vmem:[#allocation2 + $0x18] sm:$0xff] %v2663
        %2696 = vst [vmem:[#allocation2 + $0x20] sm:$0xff] %v2664
        %2697 = vst [vmem:[#allocation2 + $0x28] sm:$0xff] %v2665
        %2698 = vst [vmem:[#allocation2 + $0x30] sm:$0xff] %v2666
        %2699 = vst [vmem:[#allocation2 + $0x38] sm:$0xff] %v2667
        %2700 = vst [vmem:[#allocation2 + $0x40] sm:$0xff] %v2668
        %2701 = vst [vmem:[#allocation2 + $0x48] sm:$0xff] %v2669
        %2702 = vst [vmem:[#allocation2 + $0x50] sm:$0xff] %v2670
        %2703 = vst [vmem:[#allocation2 + $0x58] sm:$0xff] %v2671
        %2704 = vst [vmem:[#allocation2 + $0x60] sm:$0xff] %v2672
        %2705 = vst [vmem:[#allocation2 + $0x68] sm:$0xff] %v2673
        %2706 = vst [vmem:[#allocation2 + $0x70] sm:$0xff] %v2674
        %2707 = vst [vmem:[#allocation2 + $0x78] sm:$0xff] %v2675
        %2708 = vst [vmem:[#allocation2 + $0x80] sm:$0xff] %v2676
        %2709 = vst [vmem:[#allocation2 + $0x88] sm:$0xff] %v2677
        %2710 = vst [vmem:[#allocation2 + $0x90] sm:$0xff] %v2678
        %2711 = vst [vmem:[#allocation2 + $0x98] sm:$0xff] %v2679
        %2712 = vst [vmem:[#allocation2 + $0xa0] sm:$0xff] %v2680
        %2713 = vst [vmem:[#allocation2 + $0xa8] sm:$0xff] %v2681
        %2714 = vst [vmem:[#allocation2 + $0xb0] sm:$0xff] %v2682
        %2715 = vst [vmem:[#allocation2 + $0xb8] sm:$0xff] %v2683
        %2716 = vst [vmem:[#allocation2 + $0xc0] sm:$0xff] %v2684
        %2717 = vst [vmem:[#allocation2 + $0xc8] sm:$0xff] %v2685
        %2718 = vst [vmem:[#allocation2 + $0xd0] sm:$0xff] %v2686
        %2719 = vst [vmem:[#allocation2 + $0xd8] sm:$0xff] %v2687
        %2720 = vst [vmem:[#allocation2 + $0xe0] sm:$0xff] %v2688
        %2721 = vst [vmem:[#allocation2 + $0xe8] sm:$0xff] %v2689
        %2722 = vst [vmem:[#allocation2 + $0xf0] sm:$0xff] %v2690
        %2723 = vst [vmem:[#allocation2 + $0xf8] sm:$0xff] %v2691
        %v2724 = vld [vmem:[#allocation2] sm:$0xff]
        %v2725 = vld [vmem:[#allocation2 + $0x8] sm:$0xff]
        %v2726 = vld [vmem:[#allocation2 + $0x10] sm:$0xff]
        %v2727 = vld [vmem:[#allocation2 + $0x18] sm:$0xff]
        %v2728 = vld [vmem:[#allocation2 + $0x20] sm:$0xff]
        %v2729 = vld [vmem:[#allocation2 + $0x28] sm:$0xff]
        %v2730 = vld [vmem:[#allocation2 + $0x30] sm:$0xff]
        %v2731 = vld [vmem:[#allocation2 + $0x38] sm:$0xff]
        %v2732 = vld [vmem:[#allocation2 + $0x40] sm:$0xff]
        %v2733 = vld [vmem:[#allocation2 + $0x48] sm:$0xff]
        %v2734 = vld [vmem:[#allocation2 + $0x50] sm:$0xff]
        %v2735 = vld [vmem:[#allocation2 + $0x58] sm:$0xff]
        %v2736 = vld [vmem:[#allocation2 + $0x60] sm:$0xff]
        %v2737 = vld [vmem:[#allocation2 + $0x68] sm:$0xff]
        %v2738 = vld [vmem:[#allocation2 + $0x70] sm:$0xff]
        %v2739 = vld [vmem:[#allocation2 + $0x78] sm:$0xff]
        %v2740 = vld [vmem:[#allocation2 + $0x80] sm:$0xff]
        %v2741 = vld [vmem:[#allocation2 + $0x88] sm:$0xff]
        %v2742 = vld [vmem:[#allocation2 + $0x90] sm:$0xff]
        %v2743 = vld [vmem:[#allocation2 + $0x98] sm:$0xff]
        %v2744 = vld [vmem:[#allocation2 + $0xa0] sm:$0xff]
        %v2745 = vld [vmem:[#allocation2 + $0xa8] sm:$0xff]
        %v2746 = vld [vmem:[#allocation2 + $0xb0] sm:$0xff]
        %v2747 = vld [vmem:[#allocation2 + $0xb8] sm:$0xff]
        %v2748 = vld [vmem:[#allocation2 + $0xc0] sm:$0xff]
        %v2749 = vld [vmem:[#allocation2 + $0xc8] sm:$0xff]
        %v2750 = vld [vmem:[#allocation2 + $0xd0] sm:$0xff]
        %v2751 = vld [vmem:[#allocation2 + $0xd8] sm:$0xff]
        %v2752 = vld [vmem:[#allocation2 + $0xe0] sm:$0xff]
        %v2753 = vld [vmem:[#allocation2 + $0xe8] sm:$0xff]
        %v2754 = vld [vmem:[#allocation2 + $0xf0] sm:$0xff]
        %v2755 = vld [vmem:[#allocation2 + $0xf8] sm:$0xff]
        %v2756 = vmax.f32 %v2724, 0.0
        %v2757 = vmax.f32 %v2725, 0.0
        %v2758 = vmax.f32 %v2726, 0.0
        %v2759 = vmax.f32 %v2727, 0.0
        %v2760 = vmax.f32 %v2728, 0.0
        %v2761 = vmax.f32 %v2729, 0.0
        %v2762 = vmax.f32 %v2730, 0.0
        %v2763 = vmax.f32 %v2731, 0.0
        %v2764 = vmax.f32 %v2732, 0.0
        %v2765 = vmax.f32 %v2733, 0.0
        %v2766 = vmax.f32 %v2734, 0.0
        %v2767 = vmax.f32 %v2735, 0.0
        %v2768 = vmax.f32 %v2736, 0.0
        %v2769 = vmax.f32 %v2737, 0.0
        %v2770 = vmax.f32 %v2738, 0.0
        %v2771 = vmax.f32 %v2739, 0.0
        %v2772 = vmax.f32 %v2740, 0.0
        %v2773 = vmax.f32 %v2741, 0.0
        %v2774 = vmax.f32 %v2742, 0.0
        %v2775 = vmax.f32 %v2743, 0.0
        %v2776 = vmax.f32 %v2744, 0.0
        %v2777 = vmax.f32 %v2745, 0.0
        %v2778 = vmax.f32 %v2746, 0.0
        %v2779 = vmax.f32 %v2747, 0.0
        %v2780 = vmax.f32 %v2748, 0.0
        %v2781 = vmax.f32 %v2749, 0.0
        %v2782 = vmax.f32 %v2750, 0.0
        %v2783 = vmax.f32 %v2751, 0.0
        %v2784 = vmax.f32 %v2752, 0.0
        %v2785 = vmax.f32 %v2753, 0.0
        %v2786 = vmax.f32 %v2754, 0.0
        %v2787 = vmax.f32 %v2755, 0.0
        %2788 = vst [vmem:[%s252] sm:$0xff] %v2756
        %2789 = vst [vmem:[%s252 + $0x8] sm:$0xff] %v2757
        %2790 = vst [vmem:[%s252 + $0x10] sm:$0xff] %v2758
        %2791 = vst [vmem:[%s252 + $0x18] sm:$0xff] %v2759
        %2792 = vst [vmem:[%s252 + $0x20] sm:$0xff] %v2760
        %2793 = vst [vmem:[%s252 + $0x28] sm:$0xff] %v2761
        %2794 = vst [vmem:[%s252 + $0x30] sm:$0xff] %v2762
        %2795 = vst [vmem:[%s252 + $0x38] sm:$0xff] %v2763
        %2796 = vst [vmem:[%s252 + $0x40] sm:$0xff] %v2764
        %2797 = vst [vmem:[%s252 + $0x48] sm:$0xff] %v2765
        %2798 = vst [vmem:[%s252 + $0x50] sm:$0xff] %v2766
        %2799 = vst [vmem:[%s252 + $0x58] sm:$0xff] %v2767
        %2800 = vst [vmem:[%s252 + $0x60] sm:$0xff] %v2768
        %2801 = vst [vmem:[%s252 + $0x68] sm:$0xff] %v2769
        %2802 = vst [vmem:[%s252 + $0x70] sm:$0xff] %v2770
        %2803 = vst [vmem:[%s252 + $0x78] sm:$0xff] %v2771
        %2804 = vst [vmem:[%s252 + $0x80] sm:$0xff] %v2772
        %2805 = vst [vmem:[%s252 + $0x88] sm:$0xff] %v2773
        %2806 = vst [vmem:[%s252 + $0x90] sm:$0xff] %v2774
        %2807 = vst [vmem:[%s252 + $0x98] sm:$0xff] %v2775
        %2808 = vst [vmem:[%s252 + $0xa0] sm:$0xff] %v2776
        %2809 = vst [vmem:[%s252 + $0xa8] sm:$0xff] %v2777
        %2810 = vst [vmem:[%s252 + $0xb0] sm:$0xff] %v2778
        %2811 = vst [vmem:[%s252 + $0xb8] sm:$0xff] %v2779
        %2812 = vst [vmem:[%s252 + $0xc0] sm:$0xff] %v2780
        %2813 = vst [vmem:[%s252 + $0xc8] sm:$0xff] %v2781
        %2814 = vst [vmem:[%s252 + $0xd0] sm:$0xff] %v2782
        %2815 = vst [vmem:[%s252 + $0xd8] sm:$0xff] %v2783
        %2816 = vst [vmem:[%s252 + $0xe0] sm:$0xff] %v2784
        %2817 = vst [vmem:[%s252 + $0xe8] sm:$0xff] %v2785
        %2818 = vst [vmem:[%s252 + $0xf0] sm:$0xff] %v2786
        %2819 = vst [vmem:[%s252 + $0xf8] sm:$0xff] %v2787
        %s2820 = sand.u32 %s130, 1
        %s2821 = scalar_lea.sflag [#allocation5], %s2820
        %s2822 = sand.u32 %s130, 1
        %s2823 = smul.addr %s2822, 256
        %s2824 = scalar_lea.vmem [#allocation9], %s2823
        // Predicated region
        $region45: #{tpu_custom_call.1} parent=31 // pred_check
          %p2825 = pneg %p140
        $region46: #{tpu_custom_call.1} parent=31 // pred_check_branch
          %2827 = sbr.rel (%p2825) target = $region48
        $region47: #{tpu_custom_call.1} parent=31 // pred_region
          %s2828 = smul.u32 32, %s28
          %s2830 = ssub.s32 4096, 4096
          %2831 = vsyncadd %s2821, %s2830
          %s2832 = sadd.s32 %s27, %s2828
          %s2833 = smul.addr %s26, 32
          %s2834 = sadd.s32 %s2832, %s2833
          %s2835 = smul.addr %s2834, 128
          %s2836 = scalar_lea.hbm %s3, %s2835
          %s2837 = sshll.u32 %s2824, 4
          %s2838 = int_to_ptr.vmem [resolvable:$true] %s2837
          %2843 = dma.vmem_to_hbm [thread:$0]  %s2838, 4096, %s2836, %s2821, 128, 128, 8
        $region48: #{tpu_custom_call.1} parent=31 // pred_fallthru
          _
      $region32: #{tpu_custom_call.1} parent=5 // pred_fallthru
        _
      %p2844 = scmp.le.s32.totalorder 2, %s16
      // Predicated region
      $region49: #{tpu_custom_call.1} parent=5 // pred_check
        %p2845 = pneg %p2844
      $region50: #{tpu_custom_call.1} parent=5 // pred_check_branch
        %2847 = sbr.rel (%p2845) target = $region52
      $region51: #{tpu_custom_call.1} parent=5 // pred_region
        %s2848 = ssub.s32 %s16, 2
        // Predicated region
        $region53: #{tpu_custom_call.1} parent=51 // pred_check
          %p2849 = pneg %p146
        $region54: #{tpu_custom_call.1} parent=51 // pred_check_branch
          %2851 = sbr.rel (%p2849) target = $region56
        $region55: #{tpu_custom_call.1} parent=51 // pred_region
          %s2852 = sand.u32 %s131, 1
          %s2853 = scalar_lea.sflag [#allocation5], %s2852
          %s2854 = sand.u32 %s131, 1
          %s2855 = smul.addr %s2854, 256
          %s2856 = scalar_lea.vmem [#allocation9], %s2855
          %2857 = dma.done %s2853, 4096
        $region56: #{tpu_custom_call.1} parent=51 // pred_fallthru
          _
      $region52: #{tpu_custom_call.1} parent=5 // pred_fallthru
        _
    $region6: #{tpu_custom_call.1} parent=1 // loop_footer
      %s20 = sadd.s32 1, %s16
    $region7: #{tpu_custom_call.1} parent=1 // loop_footer_branch
      %15 = sbr.rel target = $region3
    $region8: #{tpu_custom_call.1} parent=1 // loop_exit
      _
    %2858 = vsyncpa [#allocation4], 1
    %s2859 = scalar_lea.sflag [#allocation4], 1
    %2860 = vsyncpa %s2859, 1
    %2861 = vsyncpa [#allocation7], 1
    %2862 = vsyncpa [#allocation5], 1
    %s2863 = scalar_lea.sflag [#allocation5], 1
    %2864 = vsyncpa %s2863, 1

</llo_original>
